<compile_context>
chip_gen: v6e
topology: v6e:2x2x1
jax: 0.10.0
libtpu: 0.0.40
codegen_flags: <defaults>
</compile_context>

<pallas_src>
import functools

import jax
import jax.numpy as jnp
import numpy as np
from jax.experimental import pallas as pl
from jax.experimental.pallas import tpu as pltpu

EPS = 1e-5


# ---------------------------------------------------------------------------
# Fused kernel: one (batch, output-row block) per grid step
# ---------------------------------------------------------------------------
def _bottleneck_kernel(x_ref, w1_ref, b1_ref, w2_ref, b2_ref, w3_ref, b3_ref,
                       *rest, stride, H, W, Wo, TRo, with_residual):
    if with_residual:
        wid_ref, bid_ref, o_ref, ypad_ref = rest
    else:
        o_ref, ypad_ref = rest

    TRin = (TRo - 1) * stride + 3          # input rows incl. 1-row halo
    step = TRo * stride                    # input-row advance per block
    Cin = x_ref.shape[-1]
    Cmid = w1_ref.shape[-1]
    Cout = w3_ref.shape[-1]
    j = pl.program_id(1)

    # ---- stage 1: 1x1 conv (channel matmul) + folded BN1 + ReLU6 ----------
    # MXU work (stage 1 + residual) is hoisted above the scratch stores so it
    # can overlap the VPU-only depthwise stage.
    xb = x_ref[0, 0]                                       # (TRin, W, Cin)
    x2d = xb.reshape(TRin * W, Cin)
    y1 = jnp.dot(x2d, w1_ref[...], preferred_element_type=jnp.float32)
    y1 = jnp.clip(y1 + b1_ref[...], 0.0, 6.0)

    if with_residual:                                      # stride == 1 only
        res = jnp.dot(xb[1:1 + TRo].reshape(TRo * W, Cin), wid_ref[...],
                      preferred_element_type=jnp.float32) + bid_ref[...]

    # ---- stage 2 input: (TRin, W+2, Cmid) scratch with 1-col W halo -------
    # Interior is fully overwritten; only the halo strips get zeroed.
    ypad_ref[:, pl.ds(1, W), :] = y1.reshape(TRin, W, Cmid)
    zcol = jnp.zeros((TRin, 1, Cmid), jnp.float32)
    ypad_ref[:, pl.ds(0, 1), :] = zcol
    ypad_ref[:, pl.ds(W + 1, 1), :] = zcol

    # Halo rows that fall outside the image (clamped in the host-side row
    # gather) must be zero for the depthwise conv's zero padding: at most the
    # first row of block 0 and the last row of the last block.
    zrow = jnp.zeros((1, W + 2, Cmid), jnp.float32)

    @pl.when(j == 0)
    def _():
        ypad_ref[pl.ds(0, 1)] = zrow

    @pl.when(j * step + TRin - 2 >= H)
    def _():
        ypad_ref[pl.ds(TRin - 1, 1)] = zrow

    # ---- stage 2: depthwise 3x3 (pad=1, stride) + folded BN2 + ReLU6 ------
    # Accumulator spans only this TRo-row block -> stays register/VMEM
    # resident instead of 9 full-image load-FMA-store passes.
    acc = jnp.zeros((TRo, Wo, Cmid), jnp.float32)
    for kh in range(3):
        for kw in range(3):
            if stride == 1:
                tap = ypad_ref[pl.ds(kh, TRo), pl.ds(kw, Wo), :]
            else:
                tap = ypad_ref[pl.ds(kh, TRo, stride=stride),
                               pl.ds(kw, Wo, stride=stride), :]
            acc = acc + tap * w2_ref[kh, kw, :]
    y2 = jnp.clip(acc + b2_ref[...], 0.0, 6.0)

    # ---- stage 3: 1x1 conv + folded BN3 (+ identity add) + ReLU6 ----------
    z = jnp.dot(y2.reshape(TRo * Wo, Cmid), w3_ref[...],
                preferred_element_type=jnp.float32) + b3_ref[...]
    if with_residual:
        z = z + res
    z = jnp.clip(z, 0.0, 6.0)
    o_ref[...] = z.reshape(1, TRo, Wo, Cout).astype(o_ref.dtype)


# ---------------------------------------------------------------------------
# Host-side wrapper: BN folding, overlapping row-block view, pallas_call
# ---------------------------------------------------------------------------
def bottleneck_forward(x_nchw, p, *, stride):
    x = jnp.transpose(x_nchw, (0, 2, 3, 1)).astype(jnp.float32)   # NCHW->NHWC
    N, H, W, Cin = x.shape
    Cmid = p["w1"].shape[1]
    Cout = p["w3"].shape[1]
    Ho = (H + 2 - 3) // stride + 1
    Wo = (W + 2 - 3) // stride + 1
    with_residual = (stride == 1)

    # Output-row block size (second, "parallel" grid axis).
    TRo = 8 if (Ho % 8 == 0) else Ho
    nj = Ho // TRo
    TRin = (TRo - 1) * stride + 3
    step = TRo * stride

    # Overlapping input row blocks with a clamped 1-row halo. Clamped (out of
    # image) rows are overwritten with zeros inside the kernel, so the value
    # gathered there does not matter. x is the smallest tensor of the block,
    # so the ~TRin/step duplication is cheap and keeps the kernel on plain
    # Blocked BlockSpecs with auto double-buffered pipelining.
    row_idx = jnp.clip(jnp.arange(nj)[:, None] * step
                       + jnp.arange(TRin)[None, :] - 1, 0, H - 1)
    x_blk = x[:, row_idx]                       # (N, nj, TRin, W, Cin)

    # Fold eval-mode BatchNorm into conv weights/biases (host, once).
    s1 = p["bn1_gamma"] * jax.lax.rsqrt(p["bn1_var"] + EPS)
    w1 = p["w1"] * s1[None, :]
    b1 = ((p["b1"] - p["bn1_mean"]) * s1 + p["bn1_beta"])[None]

    s2 = p["bn2_gamma"] * jax.lax.rsqrt(p["bn2_var"] + EPS)
    w2 = p["w2"] * s2[None, None, :]
    b2 = ((p["b2"] - p["bn2_mean"]) * s2 + p["bn2_beta"])[None]

    s3 = p["bn3_gamma"] * jax.lax.rsqrt(p["bn3_var"] + EPS)
    w3 = p["w3"] * s3[None, :]
    b3 = ((p["b3"] - p["bn3_mean"]) * s3 + p["bn3_beta"])[None]

    in_specs = [
        pl.BlockSpec((1, 1, TRin, W, Cin), lambda n, j: (n, j, 0, 0, 0)),
        pl.BlockSpec((Cin, Cmid), lambda n, j: (0, 0)),
        pl.BlockSpec((1, Cmid), lambda n, j: (0, 0)),
        pl.BlockSpec((3, 3, Cmid), lambda n, j: (0, 0, 0)),
        pl.BlockSpec((1, Cmid), lambda n, j: (0, 0)),
        pl.BlockSpec((Cmid, Cout), lambda n, j: (0, 0)),
        pl.BlockSpec((1, Cout), lambda n, j: (0, 0)),
    ]
    args = [x_blk, w1, b1, w2, b2, w3, b3]
    if with_residual:
        in_specs += [pl.BlockSpec((Cin, Cout), lambda n, j: (0, 0)),
                     pl.BlockSpec((1, Cout), lambda n, j: (0, 0))]
        args += [p["wid"], p["bid"][None]]

    # Scoped-VMEM limit from the real per-step footprint (+ headroom).
    bpe = 4
    wbytes = (Cin * Cmid + Cmid + 9 * Cmid + Cmid + Cmid * Cout + Cout
              + (Cin * Cout + Cout if with_residual else 0)) * bpe
    act_bytes = (2 * TRin * W * Cin            # double-buffered input block
                 + 2 * TRo * Wo * Cout         # double-buffered output block
                 + TRin * (W + 2) * Cmid       # ypad scratch
                 + 4 * TRin * W * Cmid) * bpe  # y1/acc/y2/z intermediates
    vmem_limit = int(min(2 * (act_bytes + 2 * wbytes) + (2 << 20), 64 << 20))

    out = pl.pallas_call(
        functools.partial(_bottleneck_kernel, stride=stride, H=H, W=W,
                          Wo=Wo, TRo=TRo, with_residual=with_residual),
        out_shape=jax.ShapeDtypeStruct((N, Ho, Wo, Cout), jnp.float32),
        grid_spec=pltpu.PrefetchScalarGridSpec(
            num_scalar_prefetch=0,
            grid=(N, nj),
            in_specs=in_specs,
            out_specs=pl.BlockSpec((1, TRo, Wo, Cout),
                                   lambda n, j: (n, j, 0, 0)),
            scratch_shapes=[pltpu.VMEM((TRin, W + 2, Cmid), jnp.float32)],
        ),
        compiler_params=pltpu.CompilerParams(
            dimension_semantics=("parallel", "parallel"),
            vmem_limit_bytes=vmem_limit),
    )(*args)

    return jnp.transpose(out, (0, 3, 1, 2))     # NHWC -> NCHW


# ---------------------------------------------------------------------------
# Pure-JAX reference (mirrors the PyTorch forward, eval-mode BatchNorm)
# ---------------------------------------------------------------------------
def reference_forward(x_nchw, p, *, stride):
    x = jnp.transpose(x_nchw, (0, 2, 3, 1))

    def conv(xx, w_hwio, b, s=1, padding="VALID", groups=1):
        y = jax.lax.conv_general_dilated(
            xx, w_hwio, (s, s), padding, feature_group_count=groups,
            dimension_numbers=("NHWC", "HWIO", "NHWC"))
        return y + b

    def bn(xx, g, bt, m, v):
        return (xx - m) / jnp.sqrt(v + EPS) * g + bt

    relu6 = lambda t: jnp.clip(t, 0.0, 6.0)

    y = relu6(bn(conv(x, p["w1"][None, None], p["b1"]),
                 p["bn1_gamma"], p["bn1_beta"], p["bn1_mean"], p["bn1_var"]))
    y = relu6(bn(conv(y, p["w2"][:, :, None, :], p["b2"], s=stride,
                      padding=((1, 1), (1, 1)), groups=y.shape[-1]),
                 p["bn2_gamma"], p["bn2_beta"], p["bn2_mean"], p["bn2_var"]))
    y = bn(conv(y, p["w3"][None, None], p["b3"]),
           p["bn3_gamma"], p["bn3_beta"], p["bn3_mean"], p["bn3_var"])
    if stride == 1:
        y = y + conv(x, p["wid"][None, None], p["bid"])
    y = relu6(y)
    return jnp.transpose(y, (0, 3, 1, 2))


# ---------------------------------------------------------------------------
# Deterministic parameter init (synthetic; shapes follow the PyTorch __init__)
# ---------------------------------------------------------------------------
def init_params(key, in_channels, out_channels, multiplier=6):
    mid = in_channels * multiplier
    ks = jax.random.split(key, 20)

    def u(k, shape, lo=-0.2, hi=0.2):
        return jax.random.uniform(k, shape, jnp.float32, lo, hi)

    return dict(
        # conv1: 1x1 in->mid, stored (Cin, Cmid) for channels-last matmul
        w1=u(ks[0], (in_channels, mid)), b1=u(ks[1], (mid,)),
        bn1_gamma=u(ks[2], (mid,), 0.5, 1.5), bn1_beta=u(ks[3], (mid,)),
        bn1_mean=u(ks[4], (mid,)), bn1_var=u(ks[5], (mid,), 0.5, 1.5),
        # conv2: depthwise 3x3, stored (3, 3, Cmid)
        w2=u(ks[6], (3, 3, mid)), b2=u(ks[7], (mid,)),
        bn2_gamma=u(ks[8], (mid,), 0.5, 1.5), bn2_beta=u(ks[9], (mid,)),
        bn2_mean=u(ks[10], (mid,)), bn2_var=u(ks[11], (mid,), 0.5, 1.5),
        # conv3: 1x1 mid->out, stored (Cmid, Cout)
        w3=u(ks[12], (mid, out_channels)), b3=u(ks[13], (out_channels,)),
        bn3_gamma=u(ks[14], (out_channels,), 0.5, 1.5),
        bn3_beta=u(ks[15], (out_channels,)),
        bn3_mean=u(ks[16], (out_channels,)),
        bn3_var=u(ks[17], (out_channels,), 0.5, 1.5),
        # identity: 1x1 in->out (no BN)
        wid=u(ks[18], (in_channels, out_channels)), bid=u(ks[19], (out_channels,)),
    )


if __name__ == "__main__":
    key = jax.random.PRNGKey(0)
    k_x, k_p = jax.random.split(key)

    batch, in_ch, out_ch, spatial = 2, 8, 16, 16
    x = jax.random.normal(k_x, (batch, in_ch, spatial, spatial), jnp.float32)  # NCHW
    params = init_params(k_p, in_ch, out_ch, multiplier=6)

    # stride=2 (module default) and stride=1 (exercises the identity-add branch)
    for stride in (2, 1):
        fwd = jax.jit(functools.partial(bottleneck_forward, stride=stride))
        ref_fn = jax.jit(functools.partial(reference_forward, stride=stride))
        out = jax.block_until_ready(fwd(x, params))
        ref = jax.block_until_ready(ref_fn(x, params))
        np.testing.assert_allclose(np.asarray(out), np.asarray(ref),
                                   rtol=1e-4, atol=1e-4)

    print("KERNEL_OK")
</pallas_src>

<mosaic_0001>
module attributes {stable_mosaic.version = 11 : i64} {
  func.func @_bottleneck_kernel(%arg0: i32, %arg1: i32, %arg2: memref<1x1x17x16x8xf32, #tpu.memory_space<vmem>>, %arg3: memref<8x48xf32, #tpu.memory_space<vmem>>, %arg4: memref<1x48xf32, #tpu.memory_space<vmem>>, %arg5: memref<3x3x48xf32, #tpu.memory_space<vmem>>, %arg6: memref<1x48xf32, #tpu.memory_space<vmem>>, %arg7: memref<48x16xf32, #tpu.memory_space<vmem>>, %arg8: memref<1x16xf32, #tpu.memory_space<vmem>>, %arg9: memref<1x8x8x16xf32, #tpu.memory_space<vmem>>, %arg10: memref<17x18x48xf32, #tpu.memory_space<vmem>>) attributes {dimension_semantics = [#tpu.dimension_semantics<parallel>, #tpu.dimension_semantics<parallel>], iteration_bounds = array<i64: 2, 1>, scalar_prefetch = 0 : i64, scratch_operands = 1 : i64, tpu.core_type = #tpu.core_type<tc>, window_params = [{transform_indices = @transform_0, window_bounds = array<i64: 1, 1, 17, 16, 8>}, {pipeline_mode = #tpu.pipeline_mode<synchronous>, transform_indices = @transform_1, window_bounds = array<i64: 8, 48>}, {pipeline_mode = #tpu.pipeline_mode<synchronous>, transform_indices = @transform_2, window_bounds = array<i64: 1, 48>}, {pipeline_mode = #tpu.pipeline_mode<synchronous>, transform_indices = @transform_3, window_bounds = array<i64: 3, 3, 48>}, {pipeline_mode = #tpu.pipeline_mode<synchronous>, transform_indices = @transform_4, window_bounds = array<i64: 1, 48>}, {pipeline_mode = #tpu.pipeline_mode<synchronous>, transform_indices = @transform_5, window_bounds = array<i64: 48, 16>}, {pipeline_mode = #tpu.pipeline_mode<synchronous>, transform_indices = @transform_6, window_bounds = array<i64: 1, 16>}, {transform_indices = @transform_7, window_bounds = array<i64: 1, 8, 8, 16>}]} {
    %c0 = arith.constant 0 : index
    %c0_0 = arith.constant 0 : index
    %c0_1 = arith.constant 0 : index
    %c0_2 = arith.constant 0 : index
    %c0_3 = arith.constant 0 : index
    %0 = vector.load %arg2[%c0, %c0_0, %c0_1, %c0_2, %c0_3] : memref<1x1x17x16x8xf32, #tpu.memory_space<vmem>>, vector<1x1x17x16x8xf32>
    %1 = vector.shape_cast %0 : vector<1x1x17x16x8xf32> to vector<17x16x8xf32>
    %2 = vector.shape_cast %1 : vector<17x16x8xf32> to vector<272x8xf32>
    %c0_4 = arith.constant 0 : index
    %c0_5 = arith.constant 0 : index
    %3 = vector.load %arg3[%c0_4, %c0_5] : memref<8x48xf32, #tpu.memory_space<vmem>>, vector<8x48xf32>
    %cst = arith.constant dense<0.000000e+00> : vector<272x48xf32>
    %4 = tpu.matmul %2, %3, %cst {dimension_numbers = #tpu.dot_dimension_numbers<[1], [0], [0], [1], [0, 0, 1, 1], [], []>} : vector<272x8xf32>, vector<8x48xf32>, vector<272x48xf32> -> vector<272x48xf32>
    %c0_6 = arith.constant 0 : index
    %c0_7 = arith.constant 0 : index
    %5 = vector.load %arg4[%c0_6, %c0_7] : memref<1x48xf32, #tpu.memory_space<vmem>>, vector<1x48xf32>
    %6 = vector.broadcast %5 : vector<1x48xf32> to vector<272x48xf32>
    %7 = arith.addf %4, %6 : vector<272x48xf32>
    %cst_8 = arith.constant 0.000000e+00 : f32
    %cst_9 = arith.constant 6.000000e+00 : f32
    %8 = vector.broadcast %cst_8 : f32 to vector<272x48xf32>
    %9 = arith.maximumf %8, %7 : vector<272x48xf32>
    %10 = vector.broadcast %cst_9 : f32 to vector<272x48xf32>
    %11 = arith.minimumf %10, %9 : vector<272x48xf32>
    %12 = vector.shape_cast %11 : vector<272x48xf32> to vector<17x16x48xf32>
    %c0_10 = arith.constant 0 : index
    %c1 = arith.constant 1 : index
    %c0_11 = arith.constant 0 : index
    %13 = vector.load %arg10[%c0_10, %c1, %c0_11] : memref<17x18x48xf32, #tpu.memory_space<vmem>>, vector<17x16x48xf32>
    tpu.vector_store %arg10[%c0_10, %c1, %c0_11], %12 {strides = array<i32>} : memref<17x18x48xf32, #tpu.memory_space<vmem>>, vector<17x16x48xf32>,
    %cst_12 = arith.constant 0.000000e+00 : f32
    %14 = vector.broadcast %cst_12 : f32 to vector<17x1x48xf32>
    %c0_13 = arith.constant 0 : index
    %c0_14 = arith.constant 0 : index
    %c0_15 = arith.constant 0 : index
    %15 = vector.load %arg10[%c0_13, %c0_14, %c0_15] : memref<17x18x48xf32, #tpu.memory_space<vmem>>, vector<17x1x48xf32>
    tpu.vector_store %arg10[%c0_13, %c0_14, %c0_15], %14 {strides = array<i32>} : memref<17x18x48xf32, #tpu.memory_space<vmem>>, vector<17x1x48xf32>,
    %c0_16 = arith.constant 0 : index
    %c17 = arith.constant 17 : index
    %c0_17 = arith.constant 0 : index
    %16 = vector.load %arg10[%c0_16, %c17, %c0_17] : memref<17x18x48xf32, #tpu.memory_space<vmem>>, vector<17x1x48xf32>
    tpu.vector_store %arg10[%c0_16, %c17, %c0_17], %14 {strides = array<i32>} : memref<17x18x48xf32, #tpu.memory_space<vmem>>, vector<17x1x48xf32>,
    %cst_18 = arith.constant 0.000000e+00 : f32
    %17 = vector.broadcast %cst_18 : f32 to vector<1x18x48xf32>
    %c0_i32 = arith.constant 0 : i32
    %18 = arith.cmpi eq, %arg1, %c0_i32 : i32
    %19 = arith.extui %18 : i1 to i32
    %c0_i32_19 = arith.constant 0 : i32
    %20 = arith.cmpi ne, %19, %c0_i32_19 : i32
    scf.if %20 {
      %c0_91 = arith.constant 0 : index
      %c0_92 = arith.constant 0 : index
      %c0_93 = arith.constant 0 : index
      %111 = vector.load %arg10[%c0_91, %c0_92, %c0_93] : memref<17x18x48xf32, #tpu.memory_space<vmem>>, vector<1x18x48xf32>
      tpu.vector_store %arg10[%c0_91, %c0_92, %c0_93], %17 {strides = array<i32>} : memref<17x18x48xf32, #tpu.memory_space<vmem>>, vector<1x18x48xf32>,
    } else {
    }
    %c16_i32 = arith.constant 16 : i32
    %21 = arith.muli %arg1, %c16_i32 : i32
    %c17_i32 = arith.constant 17 : i32
    %22 = arith.addi %21, %c17_i32 : i32
    %c2_i32 = arith.constant 2 : i32
    %23 = arith.subi %22, %c2_i32 : i32
    %c16_i32_20 = arith.constant 16 : i32
    %24 = arith.cmpi sge, %23, %c16_i32_20 : i32
    %25 = arith.extui %24 : i1 to i32
    %c0_i32_21 = arith.constant 0 : i32
    %26 = arith.cmpi ne, %25, %c0_i32_21 : i32
    scf.if %26 {
      %c16 = arith.constant 16 : index
      %c0_91 = arith.constant 0 : index
      %c0_92 = arith.constant 0 : index
      %111 = vector.load %arg10[%c16, %c0_91, %c0_92] : memref<17x18x48xf32, #tpu.memory_space<vmem>>, vector<1x18x48xf32>
      tpu.vector_store %arg10[%c16, %c0_91, %c0_92], %17 {strides = array<i32>} : memref<17x18x48xf32, #tpu.memory_space<vmem>>, vector<1x18x48xf32>,
    } else {
    }
    %cst_22 = arith.constant 0.000000e+00 : f32
    %27 = vector.broadcast %cst_22 : f32 to vector<8x8x48xf32>
    %c0_23 = arith.constant 0 : index
    %c0_24 = arith.constant 0 : index
    %c0_25 = arith.constant 0 : index
    %28 = tpu.strided_load %arg10[%c0_23, %c0_24, %c0_25] {strides = array<i32: 2, 2, 1>} : memref<17x18x48xf32, #tpu.memory_space<vmem>>, vector<8x8x48xf32>
    %c0_26 = arith.constant 0 : index
    %c0_27 = arith.constant 0 : index
    %c0_28 = arith.constant 0 : index
    %29 = vector.load %arg5[%c0_26, %c0_27, %c0_28] : memref<3x3x48xf32, #tpu.memory_space<vmem>>, vector<1x1x48xf32>
    %30 = vector.shape_cast %29 : vector<1x1x48xf32> to vector<48xf32>
    %31 = vector.shape_cast %30 : vector<48xf32> to vector<1x1x48xf32>
    %32 = vector.broadcast %31 : vector<1x1x48xf32> to vector<8x8x48xf32>
    %33 = arith.mulf %28, %32 : vector<8x8x48xf32>
    %34 = arith.addf %27, %33 : vector<8x8x48xf32>
    %c0_29 = arith.constant 0 : index
    %c1_30 = arith.constant 1 : index
    %c0_31 = arith.constant 0 : index
    %35 = tpu.strided_load %arg10[%c0_29, %c1_30, %c0_31] {strides = array<i32: 2, 2, 1>} : memref<17x18x48xf32, #tpu.memory_space<vmem>>, vector<8x8x48xf32>
    %c0_32 = arith.constant 0 : index
    %c1_33 = arith.constant 1 : index
    %c0_34 = arith.constant 0 : index
    %36 = vector.load %arg5[%c0_32, %c1_33, %c0_34] : memref<3x3x48xf32, #tpu.memory_space<vmem>>, vector<1x1x48xf32>
    %37 = vector.shape_cast %36 : vector<1x1x48xf32> to vector<48xf32>
    %38 = vector.shape_cast %37 : vector<48xf32> to vector<1x1x48xf32>
    %39 = vector.broadcast %38 : vector<1x1x48xf32> to vector<8x8x48xf32>
    %40 = arith.mulf %35, %39 : vector<8x8x48xf32>
    %41 = arith.addf %34, %40 : vector<8x8x48xf32>
    %c0_35 = arith.constant 0 : index
    %c2 = arith.constant 2 : index
    %c0_36 = arith.constant 0 : index
    %42 = tpu.strided_load %arg10[%c0_35, %c2, %c0_36] {strides = array<i32: 2, 2, 1>} : memref<17x18x48xf32, #tpu.memory_space<vmem>>, vector<8x8x48xf32>
    %c0_37 = arith.constant 0 : index
    %c2_38 = arith.constant 2 : index
    %c0_39 = arith.constant 0 : index
    %43 = vector.load %arg5[%c0_37, %c2_38, %c0_39] : memref<3x3x48xf32, #tpu.memory_space<vmem>>, vector<1x1x48xf32>
    %44 = vector.shape_cast %43 : vector<1x1x48xf32> to vector<48xf32>
    %45 = vector.shape_cast %44 : vector<48xf32> to vector<1x1x48xf32>
    %46 = vector.broadcast %45 : vector<1x1x48xf32> to vector<8x8x48xf32>
    %47 = arith.mulf %42, %46 : vector<8x8x48xf32>
    %48 = arith.addf %41, %47 : vector<8x8x48xf32>
    %c1_40 = arith.constant 1 : index
    %c0_41 = arith.constant 0 : index
    %c0_42 = arith.constant 0 : index
    %49 = tpu.strided_load %arg10[%c1_40, %c0_41, %c0_42] {strides = array<i32: 2, 2, 1>} : memref<17x18x48xf32, #tpu.memory_space<vmem>>, vector<8x8x48xf32>
    %c1_43 = arith.constant 1 : index
    %c0_44 = arith.constant 0 : index
    %c0_45 = arith.constant 0 : index
    %50 = vector.load %arg5[%c1_43, %c0_44, %c0_45] : memref<3x3x48xf32, #tpu.memory_space<vmem>>, vector<1x1x48xf32>
    %51 = vector.shape_cast %50 : vector<1x1x48xf32> to vector<48xf32>
    %52 = vector.shape_cast %51 : vector<48xf32> to vector<1x1x48xf32>
    %53 = vector.broadcast %52 : vector<1x1x48xf32> to vector<8x8x48xf32>
    %54 = arith.mulf %49, %53 : vector<8x8x48xf32>
    %55 = arith.addf %48, %54 : vector<8x8x48xf32>
    %c1_46 = arith.constant 1 : index
    %c1_47 = arith.constant 1 : index
    %c0_48 = arith.constant 0 : index
    %56 = tpu.strided_load %arg10[%c1_46, %c1_47, %c0_48] {strides = array<i32: 2, 2, 1>} : memref<17x18x48xf32, #tpu.memory_space<vmem>>, vector<8x8x48xf32>
    %c1_49 = arith.constant 1 : index
    %c1_50 = arith.constant 1 : index
    %c0_51 = arith.constant 0 : index
    %57 = vector.load %arg5[%c1_49, %c1_50, %c0_51] : memref<3x3x48xf32, #tpu.memory_space<vmem>>, vector<1x1x48xf32>
    %58 = vector.shape_cast %57 : vector<1x1x48xf32> to vector<48xf32>
    %59 = vector.shape_cast %58 : vector<48xf32> to vector<1x1x48xf32>
    %60 = vector.broadcast %59 : vector<1x1x48xf32> to vector<8x8x48xf32>
    %61 = arith.mulf %56, %60 : vector<8x8x48xf32>
    %62 = arith.addf %55, %61 : vector<8x8x48xf32>
    %c1_52 = arith.constant 1 : index
    %c2_53 = arith.constant 2 : index
    %c0_54 = arith.constant 0 : index
    %63 = tpu.strided_load %arg10[%c1_52, %c2_53, %c0_54] {strides = array<i32: 2, 2, 1>} : memref<17x18x48xf32, #tpu.memory_space<vmem>>, vector<8x8x48xf32>
    %c1_55 = arith.constant 1 : index
    %c2_56 = arith.constant 2 : index
    %c0_57 = arith.constant 0 : index
    %64 = vector.load %arg5[%c1_55, %c2_56, %c0_57] : memref<3x3x48xf32, #tpu.memory_space<vmem>>, vector<1x1x48xf32>
    %65 = vector.shape_cast %64 : vector<1x1x48xf32> to vector<48xf32>
    %66 = vector.shape_cast %65 : vector<48xf32> to vector<1x1x48xf32>
    %67 = vector.broadcast %66 : vector<1x1x48xf32> to vector<8x8x48xf32>
    %68 = arith.mulf %63, %67 : vector<8x8x48xf32>
    %69 = arith.addf %62, %68 : vector<8x8x48xf32>
    %c2_58 = arith.constant 2 : index
    %c0_59 = arith.constant 0 : index
    %c0_60 = arith.constant 0 : index
    %70 = tpu.strided_load %arg10[%c2_58, %c0_59, %c0_60] {strides = array<i32: 2, 2, 1>} : memref<17x18x48xf32, #tpu.memory_space<vmem>>, vector<8x8x48xf32>
    %c2_61 = arith.constant 2 : index
    %c0_62 = arith.constant 0 : index
    %c0_63 = arith.constant 0 : index
    %71 = vector.load %arg5[%c2_61, %c0_62, %c0_63] : memref<3x3x48xf32, #tpu.memory_space<vmem>>, vector<1x1x48xf32>
    %72 = vector.shape_cast %71 : vector<1x1x48xf32> to vector<48xf32>
    %73 = vector.shape_cast %72 : vector<48xf32> to vector<1x1x48xf32>
    %74 = vector.broadcast %73 : vector<1x1x48xf32> to vector<8x8x48xf32>
    %75 = arith.mulf %70, %74 : vector<8x8x48xf32>
    %76 = arith.addf %69, %75 : vector<8x8x48xf32>
    %c2_64 = arith.constant 2 : index
    %c1_65 = arith.constant 1 : index
    %c0_66 = arith.constant 0 : index
    %77 = tpu.strided_load %arg10[%c2_64, %c1_65, %c0_66] {strides = array<i32: 2, 2, 1>} : memref<17x18x48xf32, #tpu.memory_space<vmem>>, vector<8x8x48xf32>
    %c2_67 = arith.constant 2 : index
    %c1_68 = arith.constant 1 : index
    %c0_69 = arith.constant 0 : index
    %78 = vector.load %arg5[%c2_67, %c1_68, %c0_69] : memref<3x3x48xf32, #tpu.memory_space<vmem>>, vector<1x1x48xf32>
    %79 = vector.shape_cast %78 : vector<1x1x48xf32> to vector<48xf32>
    %80 = vector.shape_cast %79 : vector<48xf32> to vector<1x1x48xf32>
    %81 = vector.broadcast %80 : vector<1x1x48xf32> to vector<8x8x48xf32>
    %82 = arith.mulf %77, %81 : vector<8x8x48xf32>
    %83 = arith.addf %76, %82 : vector<8x8x48xf32>
    %c2_70 = arith.constant 2 : index
    %c2_71 = arith.constant 2 : index
    %c0_72 = arith.constant 0 : index
    %84 = tpu.strided_load %arg10[%c2_70, %c2_71, %c0_72] {strides = array<i32: 2, 2, 1>} : memref<17x18x48xf32, #tpu.memory_space<vmem>>, vector<8x8x48xf32>
    %c2_73 = arith.constant 2 : index
    %c2_74 = arith.constant 2 : index
    %c0_75 = arith.constant 0 : index
    %85 = vector.load %arg5[%c2_73, %c2_74, %c0_75] : memref<3x3x48xf32, #tpu.memory_space<vmem>>, vector<1x1x48xf32>
    %86 = vector.shape_cast %85 : vector<1x1x48xf32> to vector<48xf32>
    %87 = vector.shape_cast %86 : vector<48xf32> to vector<1x1x48xf32>
    %88 = vector.broadcast %87 : vector<1x1x48xf32> to vector<8x8x48xf32>
    %89 = arith.mulf %84, %88 : vector<8x8x48xf32>
    %90 = arith.addf %83, %89 : vector<8x8x48xf32>
    %c0_76 = arith.constant 0 : index
    %c0_77 = arith.constant 0 : index
    %91 = vector.load %arg6[%c0_76, %c0_77] : memref<1x48xf32, #tpu.memory_space<vmem>>, vector<1x48xf32>
    %92 = vector.shape_cast %91 : vector<1x48xf32> to vector<1x1x48xf32>
    %93 = vector.broadcast %92 : vector<1x1x48xf32> to vector<8x8x48xf32>
    %94 = arith.addf %90, %93 : vector<8x8x48xf32>
    %cst_78 = arith.constant 0.000000e+00 : f32
    %cst_79 = arith.constant 6.000000e+00 : f32
    %95 = vector.broadcast %cst_78 : f32 to vector<8x8x48xf32>
    %96 = arith.maximumf %95, %94 : vector<8x8x48xf32>
    %97 = vector.broadcast %cst_79 : f32 to vector<8x8x48xf32>
    %98 = arith.minimumf %97, %96 : vector<8x8x48xf32>
    %99 = vector.shape_cast %98 : vector<8x8x48xf32> to vector<64x48xf32>
    %c0_80 = arith.constant 0 : index
    %c0_81 = arith.constant 0 : index
    %100 = vector.load %arg7[%c0_80, %c0_81] : memref<48x16xf32, #tpu.memory_space<vmem>>, vector<48x16xf32>
    %cst_82 = arith.constant dense<0.000000e+00> : vector<64x16xf32>
    %101 = tpu.matmul %99, %100, %cst_82 {dimension_numbers = #tpu.dot_dimension_numbers<[1], [0], [0], [1], [0, 0, 1, 1], [], []>} : vector<64x48xf32>, vector<48x16xf32>, vector<64x16xf32> -> vector<64x16xf32>
    %c0_83 = arith.constant 0 : index
    %c0_84 = arith.constant 0 : index
    %102 = vector.load %arg8[%c0_83, %c0_84] : memref<1x16xf32, #tpu.memory_space<vmem>>, vector<1x16xf32>
    %103 = vector.broadcast %102 : vector<1x16xf32> to vector<64x16xf32>
    %104 = arith.addf %101, %103 : vector<64x16xf32>
    %cst_85 = arith.constant 0.000000e+00 : f32
    %cst_86 = arith.constant 6.000000e+00 : f32
    %105 = vector.broadcast %cst_85 : f32 to vector<64x16xf32>
    %106 = arith.maximumf %105, %104 : vector<64x16xf32>
    %107 = vector.broadcast %cst_86 : f32 to vector<64x16xf32>
    %108 = arith.minimumf %107, %106 : vector<64x16xf32>
    %109 = vector.shape_cast %108 : vector<64x16xf32> to vector<1x8x8x16xf32>
    %c0_87 = arith.constant 0 : index
    %c0_88 = arith.constant 0 : index
    %c0_89 = arith.constant 0 : index
    %c0_90 = arith.constant 0 : index
    %110 = vector.load %arg9[%c0_87, %c0_88, %c0_89, %c0_90] : memref<1x8x8x16xf32, #tpu.memory_space<vmem>>, vector<1x8x8x16xf32>
    tpu.vector_store %arg9[%c0_87, %c0_88, %c0_89, %c0_90], %109 {strides = array<i32>} : memref<1x8x8x16xf32, #tpu.memory_space<vmem>>, vector<1x8x8x16xf32>,
    return
  }
  func.func @transform_0(%arg0: i32, %arg1: i32) -> (i32, i32, i32, i32, i32) {
    %c0_i32 = arith.constant 0 : i32
    %c0_i32_0 = arith.constant 0 : i32
    %c0_i32_1 = arith.constant 0 : i32
    %c0_i32_2 = arith.constant 0 : i32
    return %arg0, %arg1, %c0_i32, %c0_i32_0, %c0_i32_1 : i32, i32, i32, i32, i32
  }
  func.func @transform_1(%arg0: i32, %arg1: i32) -> (i32, i32) {
    %c0_i32 = arith.constant 0 : i32
    %c0_i32_0 = arith.constant 0 : i32
    %c0_i32_1 = arith.constant 0 : i32
    return %c0_i32, %c0_i32_0 : i32, i32
  }
  func.func @transform_2(%arg0: i32, %arg1: i32) -> (i32, i32) {
    %c0_i32 = arith.constant 0 : i32
    %c0_i32_0 = arith.constant 0 : i32
    %c0_i32_1 = arith.constant 0 : i32
    return %c0_i32, %c0_i32_0 : i32, i32
  }
  func.func @transform_3(%arg0: i32, %arg1: i32) -> (i32, i32, i32) {
    %c0_i32 = arith.constant 0 : i32
    %c0_i32_0 = arith.constant 0 : i32
    %c0_i32_1 = arith.constant 0 : i32
    %c0_i32_2 = arith.constant 0 : i32
    return %c0_i32, %c0_i32_0, %c0_i32_1 : i32, i32, i32
  }
  func.func @transform_4(%arg0: i32, %arg1: i32) -> (i32, i32) {
    %c0_i32 = arith.constant 0 : i32
    %c0_i32_0 = arith.constant 0 : i32
    %c0_i32_1 = arith.constant 0 : i32
    return %c0_i32, %c0_i32_0 : i32, i32
  }
  func.func @transform_5(%arg0: i32, %arg1: i32) -> (i32, i32) {
    %c0_i32 = arith.constant 0 : i32
    %c0_i32_0 = arith.constant 0 : i32
    %c0_i32_1 = arith.constant 0 : i32
    return %c0_i32, %c0_i32_0 : i32, i32
  }
  func.func @transform_6(%arg0: i32, %arg1: i32) -> (i32, i32) {
    %c0_i32 = arith.constant 0 : i32
    %c0_i32_0 = arith.constant 0 : i32
    %c0_i32_1 = arith.constant 0 : i32
    return %c0_i32, %c0_i32_0 : i32, i32
  }
  func.func @transform_7(%arg0: i32, %arg1: i32) -> (i32, i32, i32, i32) {
    %c0_i32 = arith.constant 0 : i32
    %c0_i32_0 = arith.constant 0 : i32
    %c0_i32_1 = arith.constant 0 : i32
    return %arg0, %arg1, %c0_i32, %c0_i32_0 : i32, i32, i32, i32
  }
}

</mosaic_0001>

<llo_original>
// kernel: bottleneck_forward.1
$region0: #{bottleneck_forward.1}
  #allocation0 [shape = 'u32[]', space=smem, size = 0x4, offset = 0x4, fixed_abs, tag = 'smem constant byte address 0x4 - core index']
  #allocation1 [shape = 'u32[144,128]{1,0:T(1,128)}', space=vmem, size = 0x12000, scoped, tag = 'internal scratch']
  #allocation2 [shape = 'f32[17,18,48]{2,1,0:T(8,128)}', space=vmem, size = 0x33000, scoped, tag = 'scratch operand']
  %s0 = inlined_call_operand.vmem [shape: f32[2,1,17,16,8], index: 0, kind: input, shape index: {}]
  %s1 = inlined_call_operand.vmem [shape: f32[8,48], index: 1, kind: input, shape index: {}]
  %s2 = inlined_call_operand.vmem [shape: f32[1,48], index: 2, kind: input, shape index: {}]
  %s3 = inlined_call_operand.vmem [shape: f32[3,3,48], index: 3, kind: input, shape index: {}]
  %s4 = inlined_call_operand.vmem [shape: f32[1,48], index: 4, kind: input, shape index: {}]
  %s5 = inlined_call_operand.vmem [shape: f32[48,16], index: 5, kind: input, shape index: {}]
  %s6 = inlined_call_operand.vmem [shape: f32[1,16], index: 6, kind: input, shape index: {}]
  %s7 = inlined_call_operand.hbm [shape: f32[2,8,8,16], index: 7, kind: output, shape index: {}]
  %s8 = sld [smem:[#allocation0]]
  $region69: #{bottleneck_forward.1} parent=0
    _
  %s10 = ssub.s32 1, %s8
  %s11 = scalar_select 0, %s10, %s8
  $region1: #{bottleneck_forward.1} parent=0
    #allocation3 [shape = 'u8[65536]{0}', space=vmem, size = 0x10000, scoped, tag = 'output window, operand 0']
    #allocation4 [shape = 's32[2]{0}', space=sflag, size = 0x8, scoped, tag = 'scoped memory for bottleneck_forward.1']
    %12 = vsyncpa [#allocation4], 0
    %s13 = scalar_lea.sflag [#allocation4], 1
    %14 = vsyncpa %s13, 0
    loop: start=0, step=1, limit=4
    $region2: #{bottleneck_forward.1} parent=1 // loop_pre_header
      _
    $region3: #{bottleneck_forward.1} parent=1 // loop_header
      %s16 = sphi 0, %s20
      %p17 = scmp.ge.s32.totalorder %s16, 4
      %s23 = sphi 0, %s35
      %s24 = sphi 0, %s31
      %s25 = sphi 0, %s23
      %s26 = sphi 0, %s24
      %s27 = sphi 0, %s25
      %s28 = sphi 0, %s26
      %s40 = sphi 0, %s42
      %s43 = sphi 0, %s40
      %s44 = sphi 0, %s43
      %s60 = sphi 0, %s44
      %s64 = sphi 0, %s64
      %s66 = sphi 0, %s64
      %s67 = sphi 0, %s66
      %s81 = sphi 0, %s67
      %s85 = sphi 0, %s85
      %s87 = sphi 0, %s85
      %s88 = sphi 0, %s87
      %s102 = sphi 0, %s88
      %s106 = sphi 0, %s106
      %s108 = sphi 0, %s106
      %s109 = sphi 0, %s108
      %s123 = sphi 0, %s109
      %s127 = sphi 0, %s127
      %s129 = sphi 0, %s127
      %s130 = sphi 0, %s129
      %s144 = sphi 0, %s130
      %s148 = sphi 0, %s148
      %s150 = sphi 0, %s148
      %s151 = sphi 0, %s150
      %s165 = sphi 0, %s151
      %s169 = sphi 0, %s169
      %s171 = sphi 0, %s169
      %s172 = sphi 0, %s171
      %s186 = sphi 0, %s172
      %s194 = sphi 0, %s196
      %s197 = sphi 0, %s194
      %s198 = sphi 0, %s197
      %s214 = sphi 0, %s198
    $region4: #{bottleneck_forward.1} parent=1 // loop_header_branch
      %19 = sbr.rel (%p17) target = $region8
    $region5: #{bottleneck_forward.1} parent=1 // loop_body
      %s21 = ssub.s32 %s16, 1
      %s22 = ssub.s32 %s16, 2
      %s29 = sadd.s32 1, %s24
      %p30 = scmp.ge.s32.totalorder %s29, 1
      %s31 = scalar_select %p30, 0, %s29
      %s32 = sadd.s32 1, %s23
      %s33 = scalar_select %p30, %s32, %s23
      %p34 = scmp.ge.s32.totalorder %s33, 2
      %s35 = scalar_select %p34, 0, %s33
      %s36 = ssub.s32 %s23, %s35
      %s37 = ssub.s32 %s24, %s31
      %s38 = sor.u32 %s36, %s37
      %p39 = scmp.eq.s32.totalorder %s38, 0
      %s41 = sadd.s32 %s40, 1
      %s42 = scalar_select %p39, %s40, %s41
      %p45 = pneg %p39
      %p46 = scmp.eq.s32.totalorder %s16, 1
      %p47 = por %p45, %p46
      %p48 = scmp.ne.s32.totalorder %s40, %s43
      %p49 = scmp.eq.s32.totalorder %s16, 0
      %p50 = por %p48, %p49
      %p51 = scmp.ne.s32.totalorder %s40, %s43
      %p52 = scmp.eq.s32.totalorder %s21, 1
      %p53 = por %p51, %p52
      %p54 = scmp.ne.s32.totalorder %s43, %s44
      %p55 = scmp.eq.s32.totalorder %s21, 0
      %p56 = por %p54, %p55
      %p57 = scmp.ne.s32.totalorder %s43, %s44
      %p58 = scmp.eq.s32.totalorder %s22, 1
      %p59 = por %p57, %p58
      %p61 = scmp.ne.s32.totalorder %s44, %s60
      %p62 = scmp.eq.s32.totalorder %s22, 0
      %p63 = por %p61, %p62
      %s65 = sadd.s32 %s64, 1
      %p68 = scmp.eq.s32.totalorder %s16, 1
      %p69 = scmp.ne.s32.totalorder %s64, %s66
      %p70 = scmp.eq.s32.totalorder %s16, 0
      %p71 = por %p69, %p70
      %p72 = scmp.ne.s32.totalorder %s64, %s66
      %p73 = scmp.eq.s32.totalorder %s21, 1
      %p74 = por %p72, %p73
      %p75 = scmp.ne.s32.totalorder %s66, %s67
      %p76 = scmp.eq.s32.totalorder %s21, 0
      %p77 = por %p75, %p76
      %p78 = scmp.ne.s32.totalorder %s66, %s67
      %p79 = scmp.eq.s32.totalorder %s22, 1
      %p80 = por %p78, %p79
      %p82 = scmp.ne.s32.totalorder %s67, %s81
      %p83 = scmp.eq.s32.totalorder %s22, 0
      %p84 = por %p82, %p83
      %s86 = sadd.s32 %s85, 1
      %p89 = scmp.eq.s32.totalorder %s16, 1
      %p90 = scmp.ne.s32.totalorder %s85, %s87
      %p91 = scmp.eq.s32.totalorder %s16, 0
      %p92 = por %p90, %p91
      %p93 = scmp.ne.s32.totalorder %s85, %s87
      %p94 = scmp.eq.s32.totalorder %s21, 1
      %p95 = por %p93, %p94
      %p96 = scmp.ne.s32.totalorder %s87, %s88
      %p97 = scmp.eq.s32.totalorder %s21, 0
      %p98 = por %p96, %p97
      %p99 = scmp.ne.s32.totalorder %s87, %s88
      %p100 = scmp.eq.s32.totalorder %s22, 1
      %p101 = por %p99, %p100
      %p103 = scmp.ne.s32.totalorder %s88, %s102
      %p104 = scmp.eq.s32.totalorder %s22, 0
      %p105 = por %p103, %p104
      %s107 = sadd.s32 %s106, 1
      %p110 = scmp.eq.s32.totalorder %s16, 1
      %p111 = scmp.ne.s32.totalorder %s106, %s108
      %p112 = scmp.eq.s32.totalorder %s16, 0
      %p113 = por %p111, %p112
      %p114 = scmp.ne.s32.totalorder %s106, %s108
      %p115 = scmp.eq.s32.totalorder %s21, 1
      %p116 = por %p114, %p115
      %p117 = scmp.ne.s32.totalorder %s108, %s109
      %p118 = scmp.eq.s32.totalorder %s21, 0
      %p119 = por %p117, %p118
      %p120 = scmp.ne.s32.totalorder %s108, %s109
      %p121 = scmp.eq.s32.totalorder %s22, 1
      %p122 = por %p120, %p121
      %p124 = scmp.ne.s32.totalorder %s109, %s123
      %p125 = scmp.eq.s32.totalorder %s22, 0
      %p126 = por %p124, %p125
      %s128 = sadd.s32 %s127, 1
      %p131 = scmp.eq.s32.totalorder %s16, 1
      %p132 = scmp.ne.s32.totalorder %s127, %s129
      %p133 = scmp.eq.s32.totalorder %s16, 0
      %p134 = por %p132, %p133
      %p135 = scmp.ne.s32.totalorder %s127, %s129
      %p136 = scmp.eq.s32.totalorder %s21, 1
      %p137 = por %p135, %p136
      %p138 = scmp.ne.s32.totalorder %s129, %s130
      %p139 = scmp.eq.s32.totalorder %s21, 0
      %p140 = por %p138, %p139
      %p141 = scmp.ne.s32.totalorder %s129, %s130
      %p142 = scmp.eq.s32.totalorder %s22, 1
      %p143 = por %p141, %p142
      %p145 = scmp.ne.s32.totalorder %s130, %s144
      %p146 = scmp.eq.s32.totalorder %s22, 0
      %p147 = por %p145, %p146
      %s149 = sadd.s32 %s148, 1
      %p152 = scmp.eq.s32.totalorder %s16, 1
      %p153 = scmp.ne.s32.totalorder %s148, %s150
      %p154 = scmp.eq.s32.totalorder %s16, 0
      %p155 = por %p153, %p154
      %p156 = scmp.ne.s32.totalorder %s148, %s150
      %p157 = scmp.eq.s32.totalorder %s21, 1
      %p158 = por %p156, %p157
      %p159 = scmp.ne.s32.totalorder %s150, %s151
      %p160 = scmp.eq.s32.totalorder %s21, 0
      %p161 = por %p159, %p160
      %p162 = scmp.ne.s32.totalorder %s150, %s151
      %p163 = scmp.eq.s32.totalorder %s22, 1
      %p164 = por %p162, %p163
      %p166 = scmp.ne.s32.totalorder %s151, %s165
      %p167 = scmp.eq.s32.totalorder %s22, 0
      %p168 = por %p166, %p167
      %s170 = sadd.s32 %s169, 1
      %p173 = scmp.eq.s32.totalorder %s16, 1
      %p174 = scmp.ne.s32.totalorder %s169, %s171
      %p175 = scmp.eq.s32.totalorder %s16, 0
      %p176 = por %p174, %p175
      %p177 = scmp.ne.s32.totalorder %s169, %s171
      %p178 = scmp.eq.s32.totalorder %s21, 1
      %p179 = por %p177, %p178
      %p180 = scmp.ne.s32.totalorder %s171, %s172
      %p181 = scmp.eq.s32.totalorder %s21, 0
      %p182 = por %p180, %p181
      %p183 = scmp.ne.s32.totalorder %s171, %s172
      %p184 = scmp.eq.s32.totalorder %s22, 1
      %p185 = por %p183, %p184
      %p187 = scmp.ne.s32.totalorder %s172, %s186
      %p188 = scmp.eq.s32.totalorder %s22, 0
      %p189 = por %p187, %p188
      %s190 = ssub.s32 %s23, %s35
      %s191 = ssub.s32 %s24, %s31
      %s192 = sor.u32 %s190, %s191
      %p193 = scmp.eq.s32.totalorder %s192, 0
      %s195 = sadd.s32 %s194, 1
      %s196 = scalar_select %p193, %s194, %s195
      %p199 = pneg %p193
      %p200 = scmp.eq.s32.totalorder %s16, 1
      %p201 = por %p199, %p200
      %p202 = scmp.ne.s32.totalorder %s194, %s197
      %p203 = scmp.eq.s32.totalorder %s16, 0
      %p204 = por %p202, %p203
      %p205 = scmp.ne.s32.totalorder %s194, %s197
      %p206 = scmp.eq.s32.totalorder %s21, 1
      %p207 = por %p205, %p206
      %p208 = scmp.ne.s32.totalorder %s197, %s198
      %p209 = scmp.eq.s32.totalorder %s21, 0
      %p210 = por %p208, %p209
      %p211 = scmp.ne.s32.totalorder %s197, %s198
      %p212 = scmp.eq.s32.totalorder %s22, 1
      %p213 = por %p211, %p212
      %p215 = scmp.ne.s32.totalorder %s198, %s214
      %p216 = scmp.eq.s32.totalorder %s22, 0
      %p217 = por %p215, %p216
      %p218 = scmp.le.s32.totalorder 1, %s16
      %p219 = scmp.lt.s32.totalorder %s16, 3
      %p220 = pnand %p218, %p219
      %p221 = pneg %p220
      // Predicated region
      $region9: #{bottleneck_forward.1} parent=5 // pred_check
        _
      $region10: #{bottleneck_forward.1} parent=5 // pred_check_branch
        %223 = sbr.rel (%p220) target = $region12
      $region11: #{bottleneck_forward.1} parent=5 // pred_region
        %s224 = ssub.s32 %s16, 1
        // Predicated region
        $region13: #{bottleneck_forward.1} parent=11 // pred_check
          %p225 = pneg %p77
        $region14: #{bottleneck_forward.1} parent=11 // pred_check_branch
          %227 = sbr.rel (%p225) target = $region16
        $region15: #{bottleneck_forward.1} parent=11 // pred_region
          _
        $region16: #{bottleneck_forward.1} parent=11 // pred_fallthru
          _
        // Predicated region
        $region17: #{bottleneck_forward.1} parent=11 // pred_check
          %p228 = pneg %p98
        $region18: #{bottleneck_forward.1} parent=11 // pred_check_branch
          %230 = sbr.rel (%p228) target = $region20
        $region19: #{bottleneck_forward.1} parent=11 // pred_region
          _
        $region20: #{bottleneck_forward.1} parent=11 // pred_fallthru
          _
        // Predicated region
        $region21: #{bottleneck_forward.1} parent=11 // pred_check
          %p231 = pneg %p119
        $region22: #{bottleneck_forward.1} parent=11 // pred_check_branch
          %233 = sbr.rel (%p231) target = $region24
        $region23: #{bottleneck_forward.1} parent=11 // pred_region
          _
        $region24: #{bottleneck_forward.1} parent=11 // pred_fallthru
          _
        // Predicated region
        $region25: #{bottleneck_forward.1} parent=11 // pred_check
          %p234 = pneg %p140
        $region26: #{bottleneck_forward.1} parent=11 // pred_check_branch
          %236 = sbr.rel (%p234) target = $region28
        $region27: #{bottleneck_forward.1} parent=11 // pred_region
          _
        $region28: #{bottleneck_forward.1} parent=11 // pred_fallthru
          _
        // Predicated region
        $region29: #{bottleneck_forward.1} parent=11 // pred_check
          %p237 = pneg %p161
        $region30: #{bottleneck_forward.1} parent=11 // pred_check_branch
          %239 = sbr.rel (%p237) target = $region32
        $region31: #{bottleneck_forward.1} parent=11 // pred_region
          _
        $region32: #{bottleneck_forward.1} parent=11 // pred_fallthru
          _
        // Predicated region
        $region33: #{bottleneck_forward.1} parent=11 // pred_check
          %p240 = pneg %p182
        $region34: #{bottleneck_forward.1} parent=11 // pred_check_branch
          %242 = sbr.rel (%p240) target = $region36
        $region35: #{bottleneck_forward.1} parent=11 // pred_region
          _
        $region36: #{bottleneck_forward.1} parent=11 // pred_fallthru
          _
      $region12: #{bottleneck_forward.1} parent=5 // pred_fallthru
        _
      %p243 = scmp.lt.s32.totalorder %s16, 2
      // Predicated region
      $region37: #{bottleneck_forward.1} parent=5 // pred_check
        %p244 = pneg %p243
      $region38: #{bottleneck_forward.1} parent=5 // pred_check_branch
        %246 = sbr.rel (%p244) target = $region40
      $region39: #{bottleneck_forward.1} parent=5 // pred_region
        // Predicated region
        $region41: #{bottleneck_forward.1} parent=39 // pred_check
          %p247 = pneg %p50
        $region42: #{bottleneck_forward.1} parent=39 // pred_check_branch
          %249 = sbr.rel (%p247) target = $region44
        $region43: #{bottleneck_forward.1} parent=39 // pred_region
          %p250 = scmp.lt.s32.totalorder %s23, 1
          %s251 = scalar_select %p250, %s23, 1
          %p252 = scmp.lt.s32.totalorder %s24, 0
          %s253 = scalar_select %p252, %s24, 0
          %s254 = smul.addr %s253, 34
          %s255 = smul.addr %s251, 34
          %s256 = sadd.s32 %s254, %s255
          %s257 = smul.addr %s256, 8
          %s258 = scalar_lea.vmem %s0, %s257
        $region44: #{bottleneck_forward.1} parent=39 // pred_fallthru
          _
      $region40: #{bottleneck_forward.1} parent=5 // pred_fallthru
        _
      %p259 = scmp.le.s32.totalorder 1, %s16
      %p260 = scmp.lt.s32.totalorder %s16, 3
      %p261 = pnand %p259, %p260
      %p262 = pneg %p261
      // Predicated region
      $region45: #{bottleneck_forward.1} parent=5 // pred_check
        _
      $region46: #{bottleneck_forward.1} parent=5 // pred_check_branch
        %264 = sbr.rel (%p261) target = $region48
      $region47: #{bottleneck_forward.1} parent=5 // pred_region
        %s265 = ssub.s32 %s16, 1
        %p266 = scmp.lt.s32.totalorder %s25, 1
        %s267 = scalar_select %p266, %s25, 1
        %p268 = scmp.lt.s32.totalorder %s26, 0
        %s269 = scalar_select %p268, %s26, 0
        %s270 = smul.addr %s269, 34
        %s271 = smul.addr %s267, 34
        %s272 = sadd.s32 %s270, %s271
        %s273 = smul.addr %s272, 8
        %s274 = scalar_lea.vmem %s0, %s273
        %p275 = pneg %p56
        %p276 = pneg %p53
        %p277 = pneg %p77
        %p278 = pneg %p74
        %p279 = pneg %p98
        %p280 = pneg %p95
        %p281 = pneg %p119
        %p282 = pneg %p116
        %p283 = pneg %p140
        %p284 = pneg %p137
        %p285 = pneg %p161
        %p286 = pneg %p158
        %p287 = pneg %p182
        %p288 = pneg %p179
        %p289 = pneg %p210
        %p290 = pneg %p207
        %s291 = sand.u32 %s197, 1
        %s292 = scalar_lea.sflag [#allocation4], %s291
        %s293 = sand.u32 %s197, 1
        %s294 = smul.addr %s293, 64
        %s295 = scalar_lea.vmem [#allocation3], %s294
        %p296 = scmp.lt.s32.totalorder %s25, 1
        %s297 = scalar_select %p296, %s25, 1
        %p298 = scmp.lt.s32.totalorder %s26, 0
        %s299 = scalar_select %p298, %s26, 0
        %s300 = smul.addr %s299, 34
        %s301 = smul.addr %s297, 34
        %s302 = sadd.s32 %s300, %s301
        %s303 = smul.addr %s302, 8
        %s304 = scalar_lea.vmem %s0, %s303
        %s305 = smul.u32 8, %s26
        %v306 = vld [vmem:[%s304] sm:$0xff]
        %v307 = vld [vmem:[%s304 + $0x8] sm:$0xff]
        %v308 = vld [vmem:[%s304 + $0x10] sm:$0xff]
        %v309 = vld [vmem:[%s304 + $0x18] sm:$0xff]
        %v310 = vld [vmem:[%s304 + $0x20] sm:$0xff]
        %v311 = vld [vmem:[%s304 + $0x28] sm:$0xff]
        %v312 = vld [vmem:[%s304 + $0x30] sm:$0xff]
        %v313 = vld [vmem:[%s304 + $0x38] sm:$0xff]
        %v314 = vld [vmem:[%s304 + $0x40] sm:$0xff]
        %v315 = vld [vmem:[%s304 + $0x48] sm:$0xff]
        %v316 = vld [vmem:[%s304 + $0x50] sm:$0xff]
        %v317 = vld [vmem:[%s304 + $0x58] sm:$0xff]
        %v318 = vld [vmem:[%s304 + $0x60] sm:$0xff]
        %v319 = vld [vmem:[%s304 + $0x68] sm:$0xff]
        %v320 = vld [vmem:[%s304 + $0x70] sm:$0xff]
        %v321 = vld [vmem:[%s304 + $0x78] sm:$0xff]
        %v322 = vld [vmem:[%s304 + $0x80] sm:$0xff]
        %v323 = vld [vmem:[%s304 + $0x88] sm:$0xff]
        %v324 = vld [vmem:[%s304 + $0x90] sm:$0xff]
        %v325 = vld [vmem:[%s304 + $0x98] sm:$0xff]
        %v326 = vld [vmem:[%s304 + $0xa0] sm:$0xff]
        %v327 = vld [vmem:[%s304 + $0xa8] sm:$0xff]
        %v328 = vld [vmem:[%s304 + $0xb0] sm:$0xff]
        %v329 = vld [vmem:[%s304 + $0xb8] sm:$0xff]
        %v330 = vld [vmem:[%s304 + $0xc0] sm:$0xff]
        %v331 = vld [vmem:[%s304 + $0xc8] sm:$0xff]
        %v332 = vld [vmem:[%s304 + $0xd0] sm:$0xff]
        %v333 = vld [vmem:[%s304 + $0xd8] sm:$0xff]
        %v334 = vld [vmem:[%s304 + $0xe0] sm:$0xff]
        %v335 = vld [vmem:[%s304 + $0xe8] sm:$0xff]
        %v336 = vld [vmem:[%s304 + $0xf0] sm:$0xff]
        %v337 = vld [vmem:[%s304 + $0xf8] sm:$0xff]
        %v338 = vld [vmem:[%s304 + $0x100] sm:$0xff]
        %v339 = vld [vmem:[%s304 + $0x108] sm:$0xff]
        %v340 = vld [vmem:[%s1] sm:$0xff]
        %v341 = vld [vmem:[%s2] sm:$0x1]
        %v343 = vlaneseq
        %v344 = vshrl.u32 %v343, 7
        %v345 = vsub.s32 0, %v344
        %v346 = vrot.slane %v341, %v345
        %vm348 = vcmask 64512
        %v350 = vsel %vm348, %v306, 0
        %v353 = vsel %vm348, %v307, 0
        %v356 = vsel %vm348, %v308, 0
        %v359 = vsel %vm348, %v309, 0
        %v362 = vsel %vm348, %v310, 0
        %v365 = vsel %vm348, %v311, 0
        %v368 = vsel %vm348, %v312, 0
        %v371 = vsel %vm348, %v313, 0
        %v374 = vsel %vm348, %v314, 0
        %v377 = vsel %vm348, %v315, 0
        %v380 = vsel %vm348, %v316, 0
        %v383 = vsel %vm348, %v317, 0
        %v386 = vsel %vm348, %v318, 0
        %v389 = vsel %vm348, %v319, 0
        %v392 = vsel %vm348, %v320, 0
        %v395 = vsel %vm348, %v321, 0
        %v398 = vsel %vm348, %v322, 0
        %v401 = vsel %vm348, %v323, 0
        %v404 = vsel %vm348, %v324, 0
        %v407 = vsel %vm348, %v325, 0
        %v410 = vsel %vm348, %v326, 0
        %v413 = vsel %vm348, %v327, 0
        %v416 = vsel %vm348, %v328, 0
        %v419 = vsel %vm348, %v329, 0
        %v422 = vsel %vm348, %v330, 0
        %v425 = vsel %vm348, %v331, 0
        %v428 = vsel %vm348, %v332, 0
        %v431 = vsel %vm348, %v333, 0
        %v434 = vsel %vm348, %v334, 0
        %v437 = vsel %vm348, %v335, 0
        %v440 = vsel %vm348, %v336, 0
        %v443 = vsel %vm348, %v337, 0
        %v446 = vsel %vm348, %v338, 0
        %v449 = vsel %vm348, %v339, 0
        %451 = vmatprep.subr.mxu0 0.0
        %452 = vmatpush1.msra.mxu0 0.0
        %453 = vmatprep.subr.mxu0 0.0
        %454 = vmatpush1.msra.mxu0 0.0
        %455 = vmatprep.subr.mxu0 0.0
        %456 = vmatpush1.msra.mxu0 0.0
        %457 = vmatprep.subr.mxu0 0.0
        %458 = vmatpush1.msra.mxu0 0.0
        %459 = vmatprep.subr.mxu0 0.0
        %460 = vmatpush1.msra.mxu0 0.0
        %461 = vmatprep.subr.mxu0 0.0
        %462 = vmatpush1.msra.mxu0 0.0
        %463 = vmatprep.subr.mxu0 0.0
        %464 = vmatpush1.msra.mxu0 0.0
        %465 = vmatprep.subr.mxu0 0.0
        %466 = vmatpush1.msra.mxu0 0.0
        %467 = vmatprep.subr.mxu0 0.0
        %468 = vmatpush1.msra.mxu0 0.0
        %469 = vmatprep.subr.mxu0 0.0
        %470 = vmatpush1.msra.mxu0 0.0
        %471 = vmatprep.subr.mxu0 0.0
        %472 = vmatpush1.msra.mxu0 0.0
        %473 = vmatprep.subr.mxu0 0.0
        %474 = vmatpush1.msra.mxu0 0.0
        %475 = vmatprep.subr.mxu0 0.0
        %476 = vmatpush1.msra.mxu0 0.0
        %477 = vmatprep.subr.mxu0 0.0
        %478 = vmatpush1.msra.mxu0 0.0
        %479 = vmatprep.subr.mxu0 0.0
        %480 = vmatpush1.msra.mxu0 0.0
        %481 = vmatprep.subr.mxu0 0.0
        %482 = vmatpush1.msra.mxu0 %v340
        %483 = vmatprep.subr.mxu0 0.0
        %484 = vmatpush2.msra.mxu0 0.0
        %485 = vmatprep.subr.mxu0 0.0
        %486 = vmatpush2.msra.mxu0 0.0
        %487 = vmatprep.subr.mxu0 0.0
        %488 = vmatpush2.msra.mxu0 0.0
        %489 = vmatprep.subr.mxu0 0.0
        %490 = vmatpush2.msra.mxu0 0.0
        %491 = vmatprep.subr.mxu0 0.0
        %492 = vmatpush2.msra.mxu0 0.0
        %493 = vmatprep.subr.mxu0 0.0
        %494 = vmatpush2.msra.mxu0 0.0
        %495 = vmatprep.subr.mxu0 0.0
        %496 = vmatpush2.msra.mxu0 0.0
        %497 = vmatprep.subr.mxu0 0.0
        %498 = vmatpush2.msra.mxu0 0.0
        %499 = vmatprep.subr.mxu0 0.0
        %500 = vmatpush2.msra.mxu0 0.0
        %501 = vmatprep.subr.mxu0 0.0
        %502 = vmatpush2.msra.mxu0 0.0
        %503 = vmatprep.subr.mxu0 0.0
        %504 = vmatpush2.msra.mxu0 0.0
        %505 = vmatprep.subr.mxu0 0.0
        %506 = vmatpush2.msra.mxu0 0.0
        %507 = vmatprep.subr.mxu0 0.0
        %508 = vmatpush2.msra.mxu0 0.0
        %509 = vmatprep.subr.mxu0 0.0
        %510 = vmatpush2.msra.mxu0 0.0
        %511 = vmatprep.subr.mxu0 0.0
        %512 = vmatpush2.msra.mxu0 0.0
        %513 = vmatprep.subr.mxu0 0.0
        %514 = vmatpush2.msra.mxu0 0.0
        %515 = vmatprep.mubr.f32.mxu0 0.0
        %516 = vmatmul.mubr.f32.gmra.mxu0 %v350
        %v517 = vpop.f32.mrf.mxu0
        %v518 = vadd.f32 %v346, %v517
        %v519 = vpop.f32.mrf.mxu0
        %520 = vmatprep.mubr.f32.mxu0 0.0
        %521 = vmatmul.mubr.f32.gmra.mxu0 %v353
        %v522 = vpop.f32.mrf.mxu0
        %v523 = vadd.f32 %v346, %v522
        %v524 = vpop.f32.mrf.mxu0
        %525 = vmatprep.mubr.f32.mxu0 0.0
        %526 = vmatmul.mubr.f32.gmra.mxu0 %v356
        %v527 = vpop.f32.mrf.mxu0
        %v528 = vadd.f32 %v346, %v527
        %v529 = vpop.f32.mrf.mxu0
        %530 = vmatprep.mubr.f32.mxu0 0.0
        %531 = vmatmul.mubr.f32.gmra.mxu0 %v359
        %v532 = vpop.f32.mrf.mxu0
        %v533 = vadd.f32 %v346, %v532
        %v534 = vpop.f32.mrf.mxu0
        %535 = vmatprep.mubr.f32.mxu0 0.0
        %536 = vmatmul.mubr.f32.gmra.mxu0 %v362
        %v537 = vpop.f32.mrf.mxu0
        %v538 = vadd.f32 %v346, %v537
        %v539 = vpop.f32.mrf.mxu0
        %540 = vmatprep.mubr.f32.mxu0 0.0
        %541 = vmatmul.mubr.f32.gmra.mxu0 %v365
        %v542 = vpop.f32.mrf.mxu0
        %v543 = vadd.f32 %v346, %v542
        %v544 = vpop.f32.mrf.mxu0
        %545 = vmatprep.mubr.f32.mxu0 0.0
        %546 = vmatmul.mubr.f32.gmra.mxu0 %v368
        %v547 = vpop.f32.mrf.mxu0
        %v548 = vadd.f32 %v346, %v547
        %v549 = vpop.f32.mrf.mxu0
        %550 = vmatprep.mubr.f32.mxu0 0.0
        %551 = vmatmul.mubr.f32.gmra.mxu0 %v371
        %v552 = vpop.f32.mrf.mxu0
        %v553 = vadd.f32 %v346, %v552
        %v554 = vpop.f32.mrf.mxu0
        %555 = vmatprep.mubr.f32.mxu0 0.0
        %556 = vmatmul.mubr.f32.gmra.mxu0 %v374
        %v557 = vpop.f32.mrf.mxu0
        %v558 = vadd.f32 %v346, %v557
        %v559 = vpop.f32.mrf.mxu0
        %560 = vmatprep.mubr.f32.mxu0 0.0
        %561 = vmatmul.mubr.f32.gmra.mxu0 %v377
        %v562 = vpop.f32.mrf.mxu0
        %v563 = vadd.f32 %v346, %v562
        %v564 = vpop.f32.mrf.mxu0
        %565 = vmatprep.mubr.f32.mxu0 0.0
        %566 = vmatmul.mubr.f32.gmra.mxu0 %v380
        %v567 = vpop.f32.mrf.mxu0
        %v568 = vadd.f32 %v346, %v567
        %v569 = vpop.f32.mrf.mxu0
        %570 = vmatprep.mubr.f32.mxu0 0.0
        %571 = vmatmul.mubr.f32.gmra.mxu0 %v383
        %v572 = vpop.f32.mrf.mxu0
        %v573 = vadd.f32 %v346, %v572
        %v574 = vpop.f32.mrf.mxu0
        %575 = vmatprep.mubr.f32.mxu0 0.0
        %576 = vmatmul.mubr.f32.gmra.mxu0 %v386
        %v577 = vpop.f32.mrf.mxu0
        %v578 = vadd.f32 %v346, %v577
        %v579 = vpop.f32.mrf.mxu0
        %580 = vmatprep.mubr.f32.mxu0 0.0
        %581 = vmatmul.mubr.f32.gmra.mxu0 %v389
        %v582 = vpop.f32.mrf.mxu0
        %v583 = vadd.f32 %v346, %v582
        %v584 = vpop.f32.mrf.mxu0
        %585 = vmatprep.mubr.f32.mxu0 0.0
        %586 = vmatmul.mubr.f32.gmra.mxu0 %v392
        %v587 = vpop.f32.mrf.mxu0
        %v588 = vadd.f32 %v346, %v587
        %v589 = vpop.f32.mrf.mxu0
        %590 = vmatprep.mubr.f32.mxu0 0.0
        %591 = vmatmul.mubr.f32.gmra.mxu0 %v395
        %v592 = vpop.f32.mrf.mxu0
        %v593 = vadd.f32 %v346, %v592
        %v594 = vpop.f32.mrf.mxu0
        %595 = vmatprep.mubr.f32.mxu0 0.0
        %596 = vmatmul.mubr.f32.gmra.mxu0 %v398
        %v597 = vpop.f32.mrf.mxu0
        %v598 = vadd.f32 %v346, %v597
        %v599 = vpop.f32.mrf.mxu0
        %600 = vmatprep.mubr.f32.mxu0 0.0
        %601 = vmatmul.mubr.f32.gmra.mxu0 %v401
        %v602 = vpop.f32.mrf.mxu0
        %v603 = vadd.f32 %v346, %v602
        %v604 = vpop.f32.mrf.mxu0
        %605 = vmatprep.mubr.f32.mxu0 0.0
        %606 = vmatmul.mubr.f32.gmra.mxu0 %v404
        %v607 = vpop.f32.mrf.mxu0
        %v608 = vadd.f32 %v346, %v607
        %v609 = vpop.f32.mrf.mxu0
        %610 = vmatprep.mubr.f32.mxu0 0.0
        %611 = vmatmul.mubr.f32.gmra.mxu0 %v407
        %v612 = vpop.f32.mrf.mxu0
        %v613 = vadd.f32 %v346, %v612
        %v614 = vpop.f32.mrf.mxu0
        %615 = vmatprep.mubr.f32.mxu0 0.0
        %616 = vmatmul.mubr.f32.gmra.mxu0 %v410
        %v617 = vpop.f32.mrf.mxu0
        %v618 = vadd.f32 %v346, %v617
        %v619 = vpop.f32.mrf.mxu0
        %620 = vmatprep.mubr.f32.mxu0 0.0
        %621 = vmatmul.mubr.f32.gmra.mxu0 %v413
        %v622 = vpop.f32.mrf.mxu0
        %v623 = vadd.f32 %v346, %v622
        %v624 = vpop.f32.mrf.mxu0
        %625 = vmatprep.mubr.f32.mxu0 0.0
        %626 = vmatmul.mubr.f32.gmra.mxu0 %v416
        %v627 = vpop.f32.mrf.mxu0
        %v628 = vadd.f32 %v346, %v627
        %v629 = vpop.f32.mrf.mxu0
        %630 = vmatprep.mubr.f32.mxu0 0.0
        %631 = vmatmul.mubr.f32.gmra.mxu0 %v419
        %v632 = vpop.f32.mrf.mxu0
        %v633 = vadd.f32 %v346, %v632
        %v634 = vpop.f32.mrf.mxu0
        %635 = vmatprep.mubr.f32.mxu0 0.0
        %636 = vmatmul.mubr.f32.gmra.mxu0 %v422
        %v637 = vpop.f32.mrf.mxu0
        %v638 = vadd.f32 %v346, %v637
        %v639 = vpop.f32.mrf.mxu0
        %640 = vmatprep.mubr.f32.mxu0 0.0
        %641 = vmatmul.mubr.f32.gmra.mxu0 %v425
        %v642 = vpop.f32.mrf.mxu0
        %v643 = vadd.f32 %v346, %v642
        %v644 = vpop.f32.mrf.mxu0
        %645 = vmatprep.mubr.f32.mxu0 0.0
        %646 = vmatmul.mubr.f32.gmra.mxu0 %v428
        %v647 = vpop.f32.mrf.mxu0
        %v648 = vadd.f32 %v346, %v647
        %v649 = vpop.f32.mrf.mxu0
        %650 = vmatprep.mubr.f32.mxu0 0.0
        %651 = vmatmul.mubr.f32.gmra.mxu0 %v431
        %v652 = vpop.f32.mrf.mxu0
        %v653 = vadd.f32 %v346, %v652
        %v654 = vpop.f32.mrf.mxu0
        %655 = vmatprep.mubr.f32.mxu0 0.0
        %656 = vmatmul.mubr.f32.gmra.mxu0 %v434
        %v657 = vpop.f32.mrf.mxu0
        %v658 = vadd.f32 %v346, %v657
        %v659 = vpop.f32.mrf.mxu0
        %660 = vmatprep.mubr.f32.mxu0 0.0
        %661 = vmatmul.mubr.f32.gmra.mxu0 %v437
        %v662 = vpop.f32.mrf.mxu0
        %v663 = vadd.f32 %v346, %v662
        %v664 = vpop.f32.mrf.mxu0
        %665 = vmatprep.mubr.f32.mxu0 0.0
        %666 = vmatmul.mubr.f32.gmra.mxu0 %v440
        %v667 = vpop.f32.mrf.mxu0
        %v668 = vadd.f32 %v346, %v667
        %v669 = vpop.f32.mrf.mxu0
        %670 = vmatprep.mubr.f32.mxu0 0.0
        %671 = vmatmul.mubr.f32.gmra.mxu0 %v443
        %v672 = vpop.f32.mrf.mxu0
        %v673 = vadd.f32 %v346, %v672
        %v674 = vpop.f32.mrf.mxu0
        %675 = vmatprep.mubr.f32.mxu0 0.0
        %676 = vmatmul.mubr.f32.gmra.mxu0 %v446
        %v677 = vpop.f32.mrf.mxu0
        %v678 = vadd.f32 %v346, %v677
        %v679 = vpop.f32.mrf.mxu0
        %680 = vmatprep.mubr.f32.mxu0 0.0
        %681 = vmatmul.mubr.f32.gmra.mxu0 %v449
        %v682 = vpop.f32.mrf.mxu0
        %v683 = vadd.f32 %v346, %v682
        %v684 = vpop.f32.mrf.mxu0
        %685 = vdwg.mxu0
        %v686 = vmax.f32 %v518, 0.0
        %v687 = vmax.f32 %v523, 0.0
        %v688 = vmax.f32 %v528, 0.0
        %v689 = vmax.f32 %v533, 0.0
        %v690 = vmax.f32 %v538, 0.0
        %v691 = vmax.f32 %v543, 0.0
        %v692 = vmax.f32 %v548, 0.0
        %v693 = vmax.f32 %v553, 0.0
        %v694 = vmax.f32 %v558, 0.0
        %v695 = vmax.f32 %v563, 0.0
        %v696 = vmax.f32 %v568, 0.0
        %v697 = vmax.f32 %v573, 0.0
        %v698 = vmax.f32 %v578, 0.0
        %v699 = vmax.f32 %v583, 0.0
        %v700 = vmax.f32 %v588, 0.0
        %v701 = vmax.f32 %v593, 0.0
        %v702 = vmax.f32 %v598, 0.0
        %v703 = vmax.f32 %v603, 0.0
        %v704 = vmax.f32 %v608, 0.0
        %v705 = vmax.f32 %v613, 0.0
        %v706 = vmax.f32 %v618, 0.0
        %v707 = vmax.f32 %v623, 0.0
        %v708 = vmax.f32 %v628, 0.0
        %v709 = vmax.f32 %v633, 0.0
        %v710 = vmax.f32 %v638, 0.0
        %v711 = vmax.f32 %v643, 0.0
        %v712 = vmax.f32 %v648, 0.0
        %v713 = vmax.f32 %v653, 0.0
        %v714 = vmax.f32 %v658, 0.0
        %v715 = vmax.f32 %v663, 0.0
        %v716 = vmax.f32 %v668, 0.0
        %v717 = vmax.f32 %v673, 0.0
        %v718 = vmax.f32 %v678, 0.0
        %v719 = vmax.f32 %v683, 0.0
        %v720 = vmin.f32 %v686, 6.0
        %v721 = vmin.f32 %v687, 6.0
        %v722 = vmin.f32 %v688, 6.0
        %v723 = vmin.f32 %v689, 6.0
        %v724 = vmin.f32 %v690, 6.0
        %v725 = vmin.f32 %v691, 6.0
        %v726 = vmin.f32 %v692, 6.0
        %v727 = vmin.f32 %v693, 6.0
        %v728 = vmin.f32 %v694, 6.0
        %v729 = vmin.f32 %v695, 6.0
        %v730 = vmin.f32 %v696, 6.0
        %v731 = vmin.f32 %v697, 6.0
        %v732 = vmin.f32 %v698, 6.0
        %v733 = vmin.f32 %v699, 6.0
        %v734 = vmin.f32 %v700, 6.0
        %v735 = vmin.f32 %v701, 6.0
        %v736 = vmin.f32 %v702, 6.0
        %v737 = vmin.f32 %v703, 6.0
        %v738 = vmin.f32 %v704, 6.0
        %v739 = vmin.f32 %v705, 6.0
        %v740 = vmin.f32 %v706, 6.0
        %v741 = vmin.f32 %v707, 6.0
        %v742 = vmin.f32 %v708, 6.0
        %v743 = vmin.f32 %v709, 6.0
        %v744 = vmin.f32 %v710, 6.0
        %v745 = vmin.f32 %v711, 6.0
        %v746 = vmin.f32 %v712, 6.0
        %v747 = vmin.f32 %v713, 6.0
        %v748 = vmin.f32 %v714, 6.0
        %v749 = vmin.f32 %v715, 6.0
        %v750 = vmin.f32 %v716, 6.0
        %v751 = vmin.f32 %v717, 6.0
        %v752 = vmin.f32 %v718, 6.0
        %v753 = vmin.f32 %v719, 6.0
        %vm754 = vcmask 392192
        %755 = vst.msk [vmem:[#allocation2 + $0x1] sm:$0xff] %vm754, %v720
        %756 = vst.msk [vmem:[#allocation2 + $0x9] sm:$0xff] %vm754, %v721
        %757 = vst.msk [vmem:[#allocation2 + $0x19] sm:$0xff] %vm754, %v722
        %758 = vst.msk [vmem:[#allocation2 + $0x21] sm:$0xff] %vm754, %v723
        %759 = vst.msk [vmem:[#allocation2 + $0x31] sm:$0xff] %vm754, %v724
        %760 = vst.msk [vmem:[#allocation2 + $0x39] sm:$0xff] %vm754, %v725
        %761 = vst.msk [vmem:[#allocation2 + $0x49] sm:$0xff] %vm754, %v726
        %762 = vst.msk [vmem:[#allocation2 + $0x51] sm:$0xff] %vm754, %v727
        %763 = vst.msk [vmem:[#allocation2 + $0x61] sm:$0xff] %vm754, %v728
        %764 = vst.msk [vmem:[#allocation2 + $0x69] sm:$0xff] %vm754, %v729
        %765 = vst.msk [vmem:[#allocation2 + $0x79] sm:$0xff] %vm754, %v730
        %766 = vst.msk [vmem:[#allocation2 + $0x81] sm:$0xff] %vm754, %v731
        %767 = vst.msk [vmem:[#allocation2 + $0x91] sm:$0xff] %vm754, %v732
        %768 = vst.msk [vmem:[#allocation2 + $0x99] sm:$0xff] %vm754, %v733
        %769 = vst.msk [vmem:[#allocation2 + $0xa9] sm:$0xff] %vm754, %v734
        %770 = vst.msk [vmem:[#allocation2 + $0xb1] sm:$0xff] %vm754, %v735
        %771 = vst.msk [vmem:[#allocation2 + $0xc1] sm:$0xff] %vm754, %v736
        %772 = vst.msk [vmem:[#allocation2 + $0xc9] sm:$0xff] %vm754, %v737
        %773 = vst.msk [vmem:[#allocation2 + $0xd9] sm:$0xff] %vm754, %v738
        %774 = vst.msk [vmem:[#allocation2 + $0xe1] sm:$0xff] %vm754, %v739
        %775 = vst.msk [vmem:[#allocation2 + $0xf1] sm:$0xff] %vm754, %v740
        %776 = vst.msk [vmem:[#allocation2 + $0xf9] sm:$0xff] %vm754, %v741
        %777 = vst.msk [vmem:[#allocation2 + $0x109] sm:$0xff] %vm754, %v742
        %778 = vst.msk [vmem:[#allocation2 + $0x111] sm:$0xff] %vm754, %v743
        %779 = vst.msk [vmem:[#allocation2 + $0x121] sm:$0xff] %vm754, %v744
        %780 = vst.msk [vmem:[#allocation2 + $0x129] sm:$0xff] %vm754, %v745
        %781 = vst.msk [vmem:[#allocation2 + $0x139] sm:$0xff] %vm754, %v746
        %782 = vst.msk [vmem:[#allocation2 + $0x141] sm:$0xff] %vm754, %v747
        %783 = vst.msk [vmem:[#allocation2 + $0x151] sm:$0xff] %vm754, %v748
        %784 = vst.msk [vmem:[#allocation2 + $0x159] sm:$0xff] %vm754, %v749
        %785 = vst.msk [vmem:[#allocation2 + $0x169] sm:$0xff] %vm754, %v750
        %786 = vst.msk [vmem:[#allocation2 + $0x171] sm:$0xff] %vm754, %v751
        %787 = vst.msk [vmem:[#allocation2 + $0x181] sm:$0xff] %vm754, %v752
        %788 = vst.msk [vmem:[#allocation2 + $0x189] sm:$0xff] %vm754, %v753
        %vm789 = vcmask 385024
        %790 = vst.msk [vmem:[#allocation2] sm:$0x1] %vm789, 0.0
        %791 = vst.msk [vmem:[#allocation2 + $0x18] sm:$0x1] %vm789, 0.0
        %792 = vst.msk [vmem:[#allocation2 + $0x30] sm:$0x1] %vm789, 0.0
        %793 = vst.msk [vmem:[#allocation2 + $0x48] sm:$0x1] %vm789, 0.0
        %794 = vst.msk [vmem:[#allocation2 + $0x60] sm:$0x1] %vm789, 0.0
        %795 = vst.msk [vmem:[#allocation2 + $0x78] sm:$0x1] %vm789, 0.0
        %796 = vst.msk [vmem:[#allocation2 + $0x90] sm:$0x1] %vm789, 0.0
        %797 = vst.msk [vmem:[#allocation2 + $0xa8] sm:$0x1] %vm789, 0.0
        %798 = vst.msk [vmem:[#allocation2 + $0xc0] sm:$0x1] %vm789, 0.0
        %799 = vst.msk [vmem:[#allocation2 + $0xd8] sm:$0x1] %vm789, 0.0
        %800 = vst.msk [vmem:[#allocation2 + $0xf0] sm:$0x1] %vm789, 0.0
        %801 = vst.msk [vmem:[#allocation2 + $0x108] sm:$0x1] %vm789, 0.0
        %802 = vst.msk [vmem:[#allocation2 + $0x120] sm:$0x1] %vm789, 0.0
        %803 = vst.msk [vmem:[#allocation2 + $0x138] sm:$0x1] %vm789, 0.0
        %804 = vst.msk [vmem:[#allocation2 + $0x150] sm:$0x1] %vm789, 0.0
        %805 = vst.msk [vmem:[#allocation2 + $0x168] sm:$0x1] %vm789, 0.0
        %806 = vst.msk [vmem:[#allocation2 + $0x180] sm:$0x1] %vm789, 0.0
        %807 = vst.msk [vmem:[#allocation2 + $0x11] sm:$0x1] %vm789, 0.0
        %808 = vst.msk [vmem:[#allocation2 + $0x29] sm:$0x1] %vm789, 0.0
        %809 = vst.msk [vmem:[#allocation2 + $0x41] sm:$0x1] %vm789, 0.0
        %810 = vst.msk [vmem:[#allocation2 + $0x59] sm:$0x1] %vm789, 0.0
        %811 = vst.msk [vmem:[#allocation2 + $0x71] sm:$0x1] %vm789, 0.0
        %812 = vst.msk [vmem:[#allocation2 + $0x89] sm:$0x1] %vm789, 0.0
        %813 = vst.msk [vmem:[#allocation2 + $0xa1] sm:$0x1] %vm789, 0.0
        %814 = vst.msk [vmem:[#allocation2 + $0xb9] sm:$0x1] %vm789, 0.0
        %815 = vst.msk [vmem:[#allocation2 + $0xd1] sm:$0x1] %vm789, 0.0
        %816 = vst.msk [vmem:[#allocation2 + $0xe9] sm:$0x1] %vm789, 0.0
        %817 = vst.msk [vmem:[#allocation2 + $0x101] sm:$0x1] %vm789, 0.0
        %818 = vst.msk [vmem:[#allocation2 + $0x119] sm:$0x1] %vm789, 0.0
        %819 = vst.msk [vmem:[#allocation2 + $0x131] sm:$0x1] %vm789, 0.0
        %820 = vst.msk [vmem:[#allocation2 + $0x149] sm:$0x1] %vm789, 0.0
        %821 = vst.msk [vmem:[#allocation2 + $0x161] sm:$0x1] %vm789, 0.0
        %822 = vst.msk [vmem:[#allocation2 + $0x179] sm:$0x1] %vm789, 0.0
        %823 = vst.msk [vmem:[#allocation2 + $0x191] sm:$0x1] %vm789, 0.0
        %p824 = scmp.eq.s32.totalorder %s26, 0
        // Predicated region
        $region49: #{bottleneck_forward.1} parent=47 // pred_check
          %p825 = pneg %p824
        $region50: #{bottleneck_forward.1} parent=47 // pred_check_branch
          %827 = sbr.rel (%p825) target = $region52
        $region51: #{bottleneck_forward.1} parent=47 // pred_region
          %828 = vst.msk [vmem:[#allocation2] sm:$0xff] %vm754, 0.0
          %829 = vst.msk [vmem:[#allocation2 + $0x8] sm:$0xff] %vm754, 0.0
          %vm830 = vcmask 386048
          %831 = vst.msk [vmem:[#allocation2 + $0x10] sm:$0x3] %vm830, 0.0
        $region52: #{bottleneck_forward.1} parent=47 // pred_fallthru
          _
        %s832 = smul.u32 %s26, 16
        %s833 = sadd.s32 %s832, 15
        %p834 = scmp.ge.s32.totalorder %s833, 16
        // Predicated region
        $region53: #{bottleneck_forward.1} parent=47 // pred_check
          %p835 = pneg %p834
        $region54: #{bottleneck_forward.1} parent=47 // pred_check_branch
          %837 = sbr.rel (%p835) target = $region56
        $region55: #{bottleneck_forward.1} parent=47 // pred_region
          %s838 = scalar_lea.vmem [#allocation2], 384
          %839 = vst.msk [vmem:[%s838] sm:$0xff] %vm754, 0.0
          %840 = vst.msk [vmem:[%s838 + $0x8] sm:$0xff] %vm754, 0.0
          %vm841 = vcmask 386048
          %842 = vst.msk [vmem:[%s838 + $0x10] sm:$0x3] %vm841, 0.0
        $region56: #{bottleneck_forward.1} parent=47 // pred_fallthru
          _
        %v843 = vld [vmem:[#allocation2] ss:$2 sm:$0xff]
        %s844 = scalar_lea.vmem [#allocation2], 48
        %v845 = vld [vmem:[%s844] ss:$2 sm:$0xff]
        %s846 = scalar_lea.vmem [#allocation2], 96
        %v847 = vld [vmem:[%s846] ss:$2 sm:$0xff]
        %s848 = scalar_lea.vmem [#allocation2], 144
        %v849 = vld [vmem:[%s848] ss:$2 sm:$0xff]
        %s850 = scalar_lea.vmem [#allocation2], 192
        %v851 = vld [vmem:[%s850] ss:$2 sm:$0xff]
        %s852 = scalar_lea.vmem [#allocation2], 240
        %v853 = vld [vmem:[%s852] ss:$2 sm:$0xff]
        %s854 = scalar_lea.vmem [#allocation2], 288
        %v855 = vld [vmem:[%s854] ss:$2 sm:$0xff]
        %s856 = scalar_lea.vmem [#allocation2], 336
        %v857 = vld [vmem:[%s856] ss:$2 sm:$0xff]
        %v858 = vld [vmem:[%s3] sm:$0x1]
        %v859 = vlaneseq
        %v860 = vshrl.u32 %v859, 7
        %v861 = vsub.s32 0, %v860
        %v862 = vrot.slane %v858, %v861
        %v863 = vmul.f32 %v843, %v862
        %v864 = vmul.f32 %v845, %v862
        %v865 = vmul.f32 %v847, %v862
        %v866 = vmul.f32 %v849, %v862
        %v867 = vmul.f32 %v851, %v862
        %v868 = vmul.f32 %v853, %v862
        %v869 = vmul.f32 %v855, %v862
        %v870 = vmul.f32 %v857, %v862
        %v871 = vadd.f32 %v863, 0.0
        %v872 = vadd.f32 %v864, 0.0
        %v873 = vadd.f32 %v865, 0.0
        %v874 = vadd.f32 %v866, 0.0
        %v875 = vadd.f32 %v867, 0.0
        %v876 = vadd.f32 %v868, 0.0
        %v877 = vadd.f32 %v869, 0.0
        %v878 = vadd.f32 %v870, 0.0
        %s879 = scalar_lea.vmem [#allocation2], 1
        %v880 = vld [vmem:[%s879] ss:$2 sm:$0xff]
        %s881 = scalar_lea.vmem [#allocation2], 49
        %v882 = vld [vmem:[%s881] ss:$2 sm:$0xff]
        %s883 = scalar_lea.vmem [#allocation2], 97
        %v884 = vld [vmem:[%s883] ss:$2 sm:$0xff]
        %s885 = scalar_lea.vmem [#allocation2], 145
        %v886 = vld [vmem:[%s885] ss:$2 sm:$0xff]
        %s887 = scalar_lea.vmem [#allocation2], 193
        %v888 = vld [vmem:[%s887] ss:$2 sm:$0xff]
        %s889 = scalar_lea.vmem [#allocation2], 241
        %v890 = vld [vmem:[%s889] ss:$2 sm:$0xff]
        %s891 = scalar_lea.vmem [#allocation2], 289
        %v892 = vld [vmem:[%s891] ss:$2 sm:$0xff]
        %s893 = scalar_lea.vmem [#allocation2], 337
        %v894 = vld [vmem:[%s893] ss:$2 sm:$0xff]
        %v895 = vld [vmem:[%s3 + $0x1] sm:$0x1]
        %v896 = vlaneseq
        %v897 = vshrl.u32 %v896, 7
        %v898 = vsub.s32 0, %v897
        %v899 = vrot.slane %v895, %v898
        %v900 = vmul.f32 %v880, %v899
        %v901 = vmul.f32 %v882, %v899
        %v902 = vmul.f32 %v884, %v899
        %v903 = vmul.f32 %v886, %v899
        %v904 = vmul.f32 %v888, %v899
        %v905 = vmul.f32 %v890, %v899
        %v906 = vmul.f32 %v892, %v899
        %v907 = vmul.f32 %v894, %v899
        %v908 = vadd.f32 %v871, %v900
        %v909 = vadd.f32 %v872, %v901
        %v910 = vadd.f32 %v873, %v902
        %v911 = vadd.f32 %v874, %v903
        %v912 = vadd.f32 %v875, %v904
        %v913 = vadd.f32 %v876, %v905
        %v914 = vadd.f32 %v877, %v906
        %v915 = vadd.f32 %v878, %v907
        %s916 = scalar_lea.vmem [#allocation2], 2
        %v917 = vld [vmem:[%s916] ss:$2 sm:$0xff]
        %s918 = scalar_lea.vmem [#allocation2], 50
        %v919 = vld [vmem:[%s918] ss:$2 sm:$0xff]
        %s920 = scalar_lea.vmem [#allocation2], 98
        %v921 = vld [vmem:[%s920] ss:$2 sm:$0xff]
        %s922 = scalar_lea.vmem [#allocation2], 146
        %v923 = vld [vmem:[%s922] ss:$2 sm:$0xff]
        %s924 = scalar_lea.vmem [#allocation2], 194
        %v925 = vld [vmem:[%s924] ss:$2 sm:$0xff]
        %s926 = scalar_lea.vmem [#allocation2], 242
        %v927 = vld [vmem:[%s926] ss:$2 sm:$0xff]
        %s928 = scalar_lea.vmem [#allocation2], 290
        %v929 = vld [vmem:[%s928] ss:$2 sm:$0xff]
        %s930 = scalar_lea.vmem [#allocation2], 338
        %v931 = vld [vmem:[%s930] ss:$2 sm:$0xff]
        %v932 = vld [vmem:[%s3 + $0x2] sm:$0x1]
        %v933 = vlaneseq
        %v934 = vshrl.u32 %v933, 7
        %v935 = vsub.s32 0, %v934
        %v936 = vrot.slane %v932, %v935
        %v937 = vmul.f32 %v917, %v936
        %v938 = vmul.f32 %v919, %v936
        %v939 = vmul.f32 %v921, %v936
        %v940 = vmul.f32 %v923, %v936
        %v941 = vmul.f32 %v925, %v936
        %v942 = vmul.f32 %v927, %v936
        %v943 = vmul.f32 %v929, %v936
        %v944 = vmul.f32 %v931, %v936
        %v945 = vadd.f32 %v908, %v937
        %v946 = vadd.f32 %v909, %v938
        %v947 = vadd.f32 %v910, %v939
        %v948 = vadd.f32 %v911, %v940
        %v949 = vadd.f32 %v912, %v941
        %v950 = vadd.f32 %v913, %v942
        %v951 = vadd.f32 %v914, %v943
        %v952 = vadd.f32 %v915, %v944
        %s953 = scalar_lea.vmem [#allocation2], 24
        %v954 = vld [vmem:[%s953] ss:$2 sm:$0xff]
        %s955 = scalar_lea.vmem %s953, 48 [#allocation2]
        %v956 = vld [vmem:[%s955] ss:$2 sm:$0xff]
        %s957 = scalar_lea.vmem %s953, 96 [#allocation2]
        %v958 = vld [vmem:[%s957] ss:$2 sm:$0xff]
        %s959 = scalar_lea.vmem %s953, 144 [#allocation2]
        %v960 = vld [vmem:[%s959] ss:$2 sm:$0xff]
        %s961 = scalar_lea.vmem %s953, 192 [#allocation2]
        %v962 = vld [vmem:[%s961] ss:$2 sm:$0xff]
        %s963 = scalar_lea.vmem %s953, 240 [#allocation2]
        %v964 = vld [vmem:[%s963] ss:$2 sm:$0xff]
        %s965 = scalar_lea.vmem %s953, 288 [#allocation2]
        %v966 = vld [vmem:[%s965] ss:$2 sm:$0xff]
        %s967 = scalar_lea.vmem %s953, 336 [#allocation2]
        %v968 = vld [vmem:[%s967] ss:$2 sm:$0xff]
        %s969 = scalar_lea.vmem %s3, 4
        %v970 = vld [vmem:[%s969] sm:$0x1]
        %v971 = vlaneseq
        %v972 = vshrl.u32 %v971, 7
        %v973 = vsub.s32 0, %v972
        %v974 = vrot.slane %v970, %v973
        %v975 = vmul.f32 %v954, %v974
        %v976 = vmul.f32 %v956, %v974
        %v977 = vmul.f32 %v958, %v974
        %v978 = vmul.f32 %v960, %v974
        %v979 = vmul.f32 %v962, %v974
        %v980 = vmul.f32 %v964, %v974
        %v981 = vmul.f32 %v966, %v974
        %v982 = vmul.f32 %v968, %v974
        %v983 = vadd.f32 %v945, %v975
        %v984 = vadd.f32 %v946, %v976
        %v985 = vadd.f32 %v947, %v977
        %v986 = vadd.f32 %v948, %v978
        %v987 = vadd.f32 %v949, %v979
        %v988 = vadd.f32 %v950, %v980
        %v989 = vadd.f32 %v951, %v981
        %v990 = vadd.f32 %v952, %v982
        %s991 = scalar_lea.vmem %s953, 1 [#allocation2]
        %v992 = vld [vmem:[%s991] ss:$2 sm:$0xff]
        %s993 = scalar_lea.vmem %s953, 49 [#allocation2]
        %v994 = vld [vmem:[%s993] ss:$2 sm:$0xff]
        %s995 = scalar_lea.vmem %s953, 97 [#allocation2]
        %v996 = vld [vmem:[%s995] ss:$2 sm:$0xff]
        %s997 = scalar_lea.vmem %s953, 145 [#allocation2]
        %v998 = vld [vmem:[%s997] ss:$2 sm:$0xff]
        %s999 = scalar_lea.vmem %s953, 193 [#allocation2]
        %v1000 = vld [vmem:[%s999] ss:$2 sm:$0xff]
        %s1001 = scalar_lea.vmem %s953, 241 [#allocation2]
        %v1002 = vld [vmem:[%s1001] ss:$2 sm:$0xff]
        %s1003 = scalar_lea.vmem %s953, 289 [#allocation2]
        %v1004 = vld [vmem:[%s1003] ss:$2 sm:$0xff]
        %s1005 = scalar_lea.vmem %s953, 337 [#allocation2]
        %v1006 = vld [vmem:[%s1005] ss:$2 sm:$0xff]
        %v1007 = vld [vmem:[%s969 + $0x1] sm:$0x1]
        %v1008 = vlaneseq
        %v1009 = vshrl.u32 %v1008, 7
        %v1010 = vsub.s32 0, %v1009
        %v1011 = vrot.slane %v1007, %v1010
        %v1012 = vmul.f32 %v992, %v1011
        %v1013 = vmul.f32 %v994, %v1011
        %v1014 = vmul.f32 %v996, %v1011
        %v1015 = vmul.f32 %v998, %v1011
        %v1016 = vmul.f32 %v1000, %v1011
        %v1017 = vmul.f32 %v1002, %v1011
        %v1018 = vmul.f32 %v1004, %v1011
        %v1019 = vmul.f32 %v1006, %v1011
        %v1020 = vadd.f32 %v983, %v1012
        %v1021 = vadd.f32 %v984, %v1013
        %v1022 = vadd.f32 %v985, %v1014
        %v1023 = vadd.f32 %v986, %v1015
        %v1024 = vadd.f32 %v987, %v1016
        %v1025 = vadd.f32 %v988, %v1017
        %v1026 = vadd.f32 %v989, %v1018
        %v1027 = vadd.f32 %v990, %v1019
        %s1028 = scalar_lea.vmem %s953, 2 [#allocation2]
        %v1029 = vld [vmem:[%s1028] ss:$2 sm:$0xff]
        %s1030 = scalar_lea.vmem %s953, 50 [#allocation2]
        %v1031 = vld [vmem:[%s1030] ss:$2 sm:$0xff]
        %s1032 = scalar_lea.vmem %s953, 98 [#allocation2]
        %v1033 = vld [vmem:[%s1032] ss:$2 sm:$0xff]
        %s1034 = scalar_lea.vmem %s953, 146 [#allocation2]
        %v1035 = vld [vmem:[%s1034] ss:$2 sm:$0xff]
        %s1036 = scalar_lea.vmem %s953, 194 [#allocation2]
        %v1037 = vld [vmem:[%s1036] ss:$2 sm:$0xff]
        %s1038 = scalar_lea.vmem %s953, 242 [#allocation2]
        %v1039 = vld [vmem:[%s1038] ss:$2 sm:$0xff]
        %s1040 = scalar_lea.vmem %s953, 290 [#allocation2]
        %v1041 = vld [vmem:[%s1040] ss:$2 sm:$0xff]
        %s1042 = scalar_lea.vmem %s953, 338 [#allocation2]
        %v1043 = vld [vmem:[%s1042] ss:$2 sm:$0xff]
        %v1044 = vld [vmem:[%s969 + $0x2] sm:$0x1]
        %v1045 = vlaneseq
        %v1046 = vshrl.u32 %v1045, 7
        %v1047 = vsub.s32 0, %v1046
        %v1048 = vrot.slane %v1044, %v1047
        %v1049 = vmul.f32 %v1029, %v1048
        %v1050 = vmul.f32 %v1031, %v1048
        %v1051 = vmul.f32 %v1033, %v1048
        %v1052 = vmul.f32 %v1035, %v1048
        %v1053 = vmul.f32 %v1037, %v1048
        %v1054 = vmul.f32 %v1039, %v1048
        %v1055 = vmul.f32 %v1041, %v1048
        %v1056 = vmul.f32 %v1043, %v1048
        %v1057 = vadd.f32 %v1020, %v1049
        %v1058 = vadd.f32 %v1021, %v1050
        %v1059 = vadd.f32 %v1022, %v1051
        %v1060 = vadd.f32 %v1023, %v1052
        %v1061 = vadd.f32 %v1024, %v1053
        %v1062 = vadd.f32 %v1025, %v1054
        %v1063 = vadd.f32 %v1026, %v1055
        %v1064 = vadd.f32 %v1027, %v1056
        %s1065 = scalar_lea.vmem [#allocation2], 48
        %v1066 = vld [vmem:[%s1065] ss:$2 sm:$0xff]
        %s1067 = scalar_lea.vmem %s1065, 48 [#allocation2]
        %v1068 = vld [vmem:[%s1067] ss:$2 sm:$0xff]
        %s1069 = scalar_lea.vmem %s1065, 96 [#allocation2]
        %v1070 = vld [vmem:[%s1069] ss:$2 sm:$0xff]
        %s1071 = scalar_lea.vmem %s1065, 144 [#allocation2]
        %v1072 = vld [vmem:[%s1071] ss:$2 sm:$0xff]
        %s1073 = scalar_lea.vmem %s1065, 192 [#allocation2]
        %v1074 = vld [vmem:[%s1073] ss:$2 sm:$0xff]
        %s1075 = scalar_lea.vmem %s1065, 240 [#allocation2]
        %v1076 = vld [vmem:[%s1075] ss:$2 sm:$0xff]
        %s1077 = scalar_lea.vmem %s1065, 288 [#allocation2]
        %v1078 = vld [vmem:[%s1077] ss:$2 sm:$0xff]
        %s1079 = scalar_lea.vmem %s1065, 336 [#allocation2]
        %v1080 = vld [vmem:[%s1079] ss:$2 sm:$0xff]
        %s1081 = scalar_lea.vmem %s3, 8
        %v1082 = vld [vmem:[%s1081] sm:$0x1]
        %v1083 = vlaneseq
        %v1084 = vshrl.u32 %v1083, 7
        %v1085 = vsub.s32 0, %v1084
        %v1086 = vrot.slane %v1082, %v1085
        %v1087 = vmul.f32 %v1066, %v1086
        %v1088 = vmul.f32 %v1068, %v1086
        %v1089 = vmul.f32 %v1070, %v1086
        %v1090 = vmul.f32 %v1072, %v1086
        %v1091 = vmul.f32 %v1074, %v1086
        %v1092 = vmul.f32 %v1076, %v1086
        %v1093 = vmul.f32 %v1078, %v1086
        %v1094 = vmul.f32 %v1080, %v1086
        %v1095 = vadd.f32 %v1057, %v1087
        %v1096 = vadd.f32 %v1058, %v1088
        %v1097 = vadd.f32 %v1059, %v1089
        %v1098 = vadd.f32 %v1060, %v1090
        %v1099 = vadd.f32 %v1061, %v1091
        %v1100 = vadd.f32 %v1062, %v1092
        %v1101 = vadd.f32 %v1063, %v1093
        %v1102 = vadd.f32 %v1064, %v1094
        %s1103 = scalar_lea.vmem %s1065, 1 [#allocation2]
        %v1104 = vld [vmem:[%s1103] ss:$2 sm:$0xff]
        %s1105 = scalar_lea.vmem %s1065, 49 [#allocation2]
        %v1106 = vld [vmem:[%s1105] ss:$2 sm:$0xff]
        %s1107 = scalar_lea.vmem %s1065, 97 [#allocation2]
        %v1108 = vld [vmem:[%s1107] ss:$2 sm:$0xff]
        %s1109 = scalar_lea.vmem %s1065, 145 [#allocation2]
        %v1110 = vld [vmem:[%s1109] ss:$2 sm:$0xff]
        %s1111 = scalar_lea.vmem %s1065, 193 [#allocation2]
        %v1112 = vld [vmem:[%s1111] ss:$2 sm:$0xff]
        %s1113 = scalar_lea.vmem %s1065, 241 [#allocation2]
        %v1114 = vld [vmem:[%s1113] ss:$2 sm:$0xff]
        %s1115 = scalar_lea.vmem %s1065, 289 [#allocation2]
        %v1116 = vld [vmem:[%s1115] ss:$2 sm:$0xff]
        %s1117 = scalar_lea.vmem %s1065, 337 [#allocation2]
        %v1118 = vld [vmem:[%s1117] ss:$2 sm:$0xff]
        %v1119 = vld [vmem:[%s1081 + $0x1] sm:$0x1]
        %v1120 = vlaneseq
        %v1121 = vshrl.u32 %v1120, 7
        %v1122 = vsub.s32 0, %v1121
        %v1123 = vrot.slane %v1119, %v1122
        %v1124 = vmul.f32 %v1104, %v1123
        %v1125 = vmul.f32 %v1106, %v1123
        %v1126 = vmul.f32 %v1108, %v1123
        %v1127 = vmul.f32 %v1110, %v1123
        %v1128 = vmul.f32 %v1112, %v1123
        %v1129 = vmul.f32 %v1114, %v1123
        %v1130 = vmul.f32 %v1116, %v1123
        %v1131 = vmul.f32 %v1118, %v1123
        %v1132 = vadd.f32 %v1095, %v1124
        %v1133 = vadd.f32 %v1096, %v1125
        %v1134 = vadd.f32 %v1097, %v1126
        %v1135 = vadd.f32 %v1098, %v1127
        %v1136 = vadd.f32 %v1099, %v1128
        %v1137 = vadd.f32 %v1100, %v1129
        %v1138 = vadd.f32 %v1101, %v1130
        %v1139 = vadd.f32 %v1102, %v1131
        %s1140 = scalar_lea.vmem %s1065, 2 [#allocation2]
        %v1141 = vld [vmem:[%s1140] ss:$2 sm:$0xff]
        %s1142 = scalar_lea.vmem %s1065, 50 [#allocation2]
        %v1143 = vld [vmem:[%s1142] ss:$2 sm:$0xff]
        %s1144 = scalar_lea.vmem %s1065, 98 [#allocation2]
        %v1145 = vld [vmem:[%s1144] ss:$2 sm:$0xff]
        %s1146 = scalar_lea.vmem %s1065, 146 [#allocation2]
        %v1147 = vld [vmem:[%s1146] ss:$2 sm:$0xff]
        %s1148 = scalar_lea.vmem %s1065, 194 [#allocation2]
        %v1149 = vld [vmem:[%s1148] ss:$2 sm:$0xff]
        %s1150 = scalar_lea.vmem %s1065, 242 [#allocation2]
        %v1151 = vld [vmem:[%s1150] ss:$2 sm:$0xff]
        %s1152 = scalar_lea.vmem %s1065, 290 [#allocation2]
        %v1153 = vld [vmem:[%s1152] ss:$2 sm:$0xff]
        %s1154 = scalar_lea.vmem %s1065, 338 [#allocation2]
        %v1155 = vld [vmem:[%s1154] ss:$2 sm:$0xff]
        %v1156 = vld [vmem:[%s1081 + $0x2] sm:$0x1]
        %v1157 = vlaneseq
        %v1158 = vshrl.u32 %v1157, 7
        %v1159 = vsub.s32 0, %v1158
        %v1160 = vrot.slane %v1156, %v1159
        %v1161 = vmul.f32 %v1141, %v1160
        %v1162 = vmul.f32 %v1143, %v1160
        %v1163 = vmul.f32 %v1145, %v1160
        %v1164 = vmul.f32 %v1147, %v1160
        %v1165 = vmul.f32 %v1149, %v1160
        %v1166 = vmul.f32 %v1151, %v1160
        %v1167 = vmul.f32 %v1153, %v1160
        %v1168 = vmul.f32 %v1155, %v1160
        %v1169 = vadd.f32 %v1132, %v1161
        %v1170 = vadd.f32 %v1133, %v1162
        %v1171 = vadd.f32 %v1134, %v1163
        %v1172 = vadd.f32 %v1135, %v1164
        %v1173 = vadd.f32 %v1136, %v1165
        %v1174 = vadd.f32 %v1137, %v1166
        %v1175 = vadd.f32 %v1138, %v1167
        %v1176 = vadd.f32 %v1139, %v1168
        %v1177 = vld [vmem:[%s4] sm:$0x1]
        %v1179 = vlaneseq
        %v1180 = vshrl.u32 %v1179, 7
        %v1181 = vsub.s32 0, %v1180
        %v1182 = vrot.slane %v1177, %v1181
        %v1184 = vadd.f32 %v1169, %v1182
        %v1185 = vadd.f32 %v1170, %v1182
        %v1186 = vadd.f32 %v1171, %v1182
        %v1187 = vadd.f32 %v1172, %v1182
        %v1188 = vadd.f32 %v1173, %v1182
        %v1189 = vadd.f32 %v1174, %v1182
        %v1190 = vadd.f32 %v1175, %v1182
        %v1191 = vadd.f32 %v1176, %v1182
        %v1192 = vmax.f32 %v1184, 0.0
        %v1193 = vmax.f32 %v1185, 0.0
        %v1194 = vmax.f32 %v1186, 0.0
        %v1195 = vmax.f32 %v1187, 0.0
        %v1196 = vmax.f32 %v1188, 0.0
        %v1197 = vmax.f32 %v1189, 0.0
        %v1198 = vmax.f32 %v1190, 0.0
        %v1199 = vmax.f32 %v1191, 0.0
        %v1200 = vmin.f32 %v1192, 6.0
        %v1201 = vmin.f32 %v1193, 6.0
        %v1202 = vmin.f32 %v1194, 6.0
        %v1203 = vmin.f32 %v1195, 6.0
        %v1204 = vmin.f32 %v1196, 6.0
        %v1205 = vmin.f32 %v1197, 6.0
        %v1206 = vmin.f32 %v1198, 6.0
        %v1207 = vmin.f32 %v1199, 6.0
        %v1208 = vld [vmem:[%s5] sm:$0xff]
        %v1209 = vld [vmem:[%s5 + $0x8] sm:$0xff]
        %v1210 = vld [vmem:[%s5 + $0x10] sm:$0xff]
        %v1211 = vld [vmem:[%s5 + $0x18] sm:$0xff]
        %v1212 = vld [vmem:[%s5 + $0x20] sm:$0xff]
        %v1213 = vld [vmem:[%s5 + $0x28] sm:$0xff]
        %v1214 = vld [vmem:[%s6] sm:$0x1]
        %v1216 = vlaneseq
        %v1217 = vshrl.u32 %v1216, 7
        %v1218 = vsub.s32 0, %v1217
        %v1219 = vrot.slane %v1214, %v1218
        %v1222 = vsel %vm754, %v1200, 0
        %v1225 = vsel %vm754, %v1201, 0
        %v1228 = vsel %vm754, %v1202, 0
        %v1231 = vsel %vm754, %v1203, 0
        %v1234 = vsel %vm754, %v1204, 0
        %v1237 = vsel %vm754, %v1205, 0
        %v1240 = vsel %vm754, %v1206, 0
        %v1243 = vsel %vm754, %v1207, 0
        %1245 = vmatprep.subr.mxu0 0.0
        %1246 = vmatpush1.msra.mxu0 0.0
        %1247 = vmatprep.subr.mxu0 0.0
        %1248 = vmatpush1.msra.mxu0 0.0
        %1249 = vmatprep.subr.mxu0 0.0
        %1250 = vmatpush1.msra.mxu0 0.0
        %1251 = vmatprep.subr.mxu0 0.0
        %1252 = vmatpush1.msra.mxu0 0.0
        %1253 = vmatprep.subr.mxu0 0.0
        %1254 = vmatpush1.msra.mxu0 0.0
        %1255 = vmatprep.subr.mxu0 0.0
        %1256 = vmatpush1.msra.mxu0 0.0
        %1257 = vmatprep.subr.mxu0 0.0
        %1258 = vmatpush1.msra.mxu0 0.0
        %1259 = vmatprep.subr.mxu0 0.0
        %1260 = vmatpush1.msra.mxu0 0.0
        %1261 = vmatprep.subr.mxu0 0.0
        %1262 = vmatpush1.msra.mxu0 0.0
        %1263 = vmatprep.subr.mxu0 0.0
        %1264 = vmatpush1.msra.mxu0 0.0
        %1265 = vmatprep.subr.mxu0 0.0
        %1266 = vmatpush1.msra.mxu0 %v1213
        %1267 = vmatprep.subr.mxu0 0.0
        %1268 = vmatpush1.msra.mxu0 %v1212
        %1269 = vmatprep.subr.mxu0 0.0
        %1270 = vmatpush1.msra.mxu0 %v1211
        %1271 = vmatprep.subr.mxu0 0.0
        %1272 = vmatpush1.msra.mxu0 %v1210
        %1273 = vmatprep.subr.mxu0 0.0
        %1274 = vmatpush1.msra.mxu0 %v1209
        %1275 = vmatprep.subr.mxu0 0.0
        %1276 = vmatpush1.msra.mxu0 %v1208
        %1277 = vmatprep.subr.mxu0 0.0
        %1278 = vmatpush2.msra.mxu0 0.0
        %1279 = vmatprep.subr.mxu0 0.0
        %1280 = vmatpush2.msra.mxu0 0.0
        %1281 = vmatprep.subr.mxu0 0.0
        %1282 = vmatpush2.msra.mxu0 0.0
        %1283 = vmatprep.subr.mxu0 0.0
        %1284 = vmatpush2.msra.mxu0 0.0
        %1285 = vmatprep.subr.mxu0 0.0
        %1286 = vmatpush2.msra.mxu0 0.0
        %1287 = vmatprep.subr.mxu0 0.0
        %1288 = vmatpush2.msra.mxu0 0.0
        %1289 = vmatprep.subr.mxu0 0.0
        %1290 = vmatpush2.msra.mxu0 0.0
        %1291 = vmatprep.subr.mxu0 0.0
        %1292 = vmatpush2.msra.mxu0 0.0
        %1293 = vmatprep.subr.mxu0 0.0
        %1294 = vmatpush2.msra.mxu0 0.0
        %1295 = vmatprep.subr.mxu0 0.0
        %1296 = vmatpush2.msra.mxu0 0.0
        %1297 = vmatprep.subr.mxu0 0.0
        %1298 = vmatpush2.msra.mxu0 0.0
        %1299 = vmatprep.subr.mxu0 0.0
        %1300 = vmatpush2.msra.mxu0 0.0
        %1301 = vmatprep.subr.mxu0 0.0
        %1302 = vmatpush2.msra.mxu0 0.0
        %1303 = vmatprep.subr.mxu0 0.0
        %1304 = vmatpush2.msra.mxu0 0.0
        %1305 = vmatprep.subr.mxu0 0.0
        %1306 = vmatpush2.msra.mxu0 0.0
        %1307 = vmatprep.subr.mxu0 0.0
        %1308 = vmatpush2.msra.mxu0 0.0
        %1309 = vmatprep.mubr.f32.mxu0 0.0
        %1310 = vmatmul.mubr.f32.gmra.mxu0 %v1222
        %v1311 = vpop.f32.mrf.mxu0
        %v1312 = vadd.f32 %v1219, %v1311
        %v1313 = vpop.f32.mrf.mxu0
        %1314 = vmatprep.mubr.f32.mxu0 0.0
        %1315 = vmatmul.mubr.f32.gmra.mxu0 %v1225
        %v1316 = vpop.f32.mrf.mxu0
        %v1317 = vadd.f32 %v1219, %v1316
        %v1318 = vpop.f32.mrf.mxu0
        %1319 = vmatprep.mubr.f32.mxu0 0.0
        %1320 = vmatmul.mubr.f32.gmra.mxu0 %v1228
        %v1321 = vpop.f32.mrf.mxu0
        %v1322 = vadd.f32 %v1219, %v1321
        %v1323 = vpop.f32.mrf.mxu0
        %1324 = vmatprep.mubr.f32.mxu0 0.0
        %1325 = vmatmul.mubr.f32.gmra.mxu0 %v1231
        %v1326 = vpop.f32.mrf.mxu0
        %v1327 = vadd.f32 %v1219, %v1326
        %v1328 = vpop.f32.mrf.mxu0
        %1329 = vmatprep.mubr.f32.mxu0 0.0
        %1330 = vmatmul.mubr.f32.gmra.mxu0 %v1234
        %v1331 = vpop.f32.mrf.mxu0
        %v1332 = vadd.f32 %v1219, %v1331
        %v1333 = vpop.f32.mrf.mxu0
        %1334 = vmatprep.mubr.f32.mxu0 0.0
        %1335 = vmatmul.mubr.f32.gmra.mxu0 %v1237
        %v1336 = vpop.f32.mrf.mxu0
        %v1337 = vadd.f32 %v1219, %v1336
        %v1338 = vpop.f32.mrf.mxu0
        %1339 = vmatprep.mubr.f32.mxu0 0.0
        %1340 = vmatmul.mubr.f32.gmra.mxu0 %v1240
        %v1341 = vpop.f32.mrf.mxu0
        %v1342 = vadd.f32 %v1219, %v1341
        %v1343 = vpop.f32.mrf.mxu0
        %1344 = vmatprep.mubr.f32.mxu0 0.0
        %1345 = vmatmul.mubr.f32.gmra.mxu0 %v1243
        %v1346 = vpop.f32.mrf.mxu0
        %v1347 = vadd.f32 %v1219, %v1346
        %v1348 = vpop.f32.mrf.mxu0
        %1349 = vdwg.mxu0
        %v1350 = vmax.f32 %v1312, 0.0
        %v1351 = vmax.f32 %v1317, 0.0
        %v1352 = vmax.f32 %v1322, 0.0
        %v1353 = vmax.f32 %v1327, 0.0
        %v1354 = vmax.f32 %v1332, 0.0
        %v1355 = vmax.f32 %v1337, 0.0
        %v1356 = vmax.f32 %v1342, 0.0
        %v1357 = vmax.f32 %v1347, 0.0
        %v1358 = vmin.f32 %v1350, 6.0
        %v1359 = vmin.f32 %v1351, 6.0
        %v1360 = vmin.f32 %v1352, 6.0
        %v1361 = vmin.f32 %v1353, 6.0
        %v1362 = vmin.f32 %v1354, 6.0
        %v1363 = vmin.f32 %v1355, 6.0
        %v1364 = vmin.f32 %v1356, 6.0
        %v1365 = vmin.f32 %v1357, 6.0
        %vm1366 = vcmask 130048
        %1367 = vst.msk [vmem:[%s295] sm:$0xff] %vm1366, %v1358
        %1368 = vst.msk [vmem:[%s295 + $0x8] sm:$0xff] %vm1366, %v1359
        %1369 = vst.msk [vmem:[%s295 + $0x10] sm:$0xff] %vm1366, %v1360
        %1370 = vst.msk [vmem:[%s295 + $0x18] sm:$0xff] %vm1366, %v1361
        %1371 = vst.msk [vmem:[%s295 + $0x20] sm:$0xff] %vm1366, %v1362
        %1372 = vst.msk [vmem:[%s295 + $0x28] sm:$0xff] %vm1366, %v1363
        %1373 = vst.msk [vmem:[%s295 + $0x30] sm:$0xff] %vm1366, %v1364
        %1374 = vst.msk [vmem:[%s295 + $0x38] sm:$0xff] %vm1366, %v1365
        %s1375 = sand.u32 %s197, 1
        %s1376 = scalar_lea.sflag [#allocation4], %s1375
        %s1377 = sand.u32 %s197, 1
        %s1378 = smul.addr %s1377, 64
        %s1379 = scalar_lea.vmem [#allocation3], %s1378
        // Predicated region
        $region57: #{bottleneck_forward.1} parent=47 // pred_check
          %p1380 = pneg %p207
        $region58: #{bottleneck_forward.1} parent=47 // pred_check_branch
          %1382 = sbr.rel (%p1380) target = $region60
        $region59: #{bottleneck_forward.1} parent=47 // pred_region
          %s1383 = smul.u32 8, %s26
          %s1385 = ssub.s32 1024, 1024
          %1386 = vsyncadd %s1376, %s1385
          %s1387 = smul.addr %s25, 8
          %s1388 = sadd.s32 %s1383, %s1387
          %s1389 = smul.addr %s1388, 128
          %s1390 = scalar_lea.hbm %s7, %s1389
          %s1391 = sshll.u32 %s1379, 4
          %s1392 = int_to_ptr.vmem [resolvable:$true] %s1391
          %1397 = dma.vmem_to_hbm [thread:$0]  %s1392, 1024, %s1390, %s1376, 128, 128, 8
        $region60: #{bottleneck_forward.1} parent=47 // pred_fallthru
          _
      $region48: #{bottleneck_forward.1} parent=5 // pred_fallthru
        _
      %p1398 = scmp.le.s32.totalorder 2, %s16
      // Predicated region
      $region61: #{bottleneck_forward.1} parent=5 // pred_check
        %p1399 = pneg %p1398
      $region62: #{bottleneck_forward.1} parent=5 // pred_check_branch
        %1401 = sbr.rel (%p1399) target = $region64
      $region63: #{bottleneck_forward.1} parent=5 // pred_region
        %s1402 = ssub.s32 %s16, 2
        // Predicated region
        $region65: #{bottleneck_forward.1} parent=63 // pred_check
          %p1403 = pneg %p213
        $region66: #{bottleneck_forward.1} parent=63 // pred_check_branch
          %1405 = sbr.rel (%p1403) target = $region68
        $region67: #{bottleneck_forward.1} parent=63 // pred_region
          %s1406 = sand.u32 %s198, 1
          %s1407 = scalar_lea.sflag [#allocation4], %s1406
          %s1408 = sand.u32 %s198, 1
          %s1409 = smul.addr %s1408, 64
          %s1410 = scalar_lea.vmem [#allocation3], %s1409
          %1411 = dma.done %s1407, 1024
        $region68: #{bottleneck_forward.1} parent=63 // pred_fallthru
          _
      $region64: #{bottleneck_forward.1} parent=5 // pred_fallthru
        _
    $region6: #{bottleneck_forward.1} parent=1 // loop_footer
      %s20 = sadd.s32 1, %s16
    $region7: #{bottleneck_forward.1} parent=1 // loop_footer_branch
      %15 = sbr.rel target = $region3
    $region8: #{bottleneck_forward.1} parent=1 // loop_exit
      _
    %1412 = vsyncpa [#allocation4], 1
    %s1413 = scalar_lea.sflag [#allocation4], 1
    %1414 = vsyncpa %s1413, 1

</llo_original>
